<compile_context>
chip_gen: v6e
topology: v6e:2x2x1
jax: 0.10.0
libtpu: 0.0.40
codegen_flags: <defaults>
</compile_context>

<pallas_src>
import functools
import math

import jax
import jax.numpy as jnp
from jax import lax
from jax.experimental import pallas as pl
from jax.experimental.pallas import tpu as pltpu

MXU_DTYPE = jnp.bfloat16   # MXU operand dtype; accumulation stays float32.
OUT_LANES = 128            # lane-dense output width (real logit lives in lane 0)


# -----------------------------------------------------------------------------
# Fused kernel: both LSTM stacks + MLP head in one pallas_call (no grid).
# -----------------------------------------------------------------------------
def _flat_lstm_kernel(num_layers, T, Bp, H, *refs):
    # refs = x, (w_ih_f, w_hh_f, b_f) * L, w1, b1, w2p, b2p, out, seq_scratch
    x_ref = refs[0]                                   # [T*Bp, D0]  (time-major)
    lw = refs[1:1 + 3 * num_layers]
    w1_ref, b1_ref, w2_ref, b2_ref = refs[1 + 3 * num_layers:5 + 3 * num_layers]
    out_ref = refs[5 + 3 * num_layers]                # [Bp, 128]
    seq_ref = refs[6 + 3 * num_layers]                # [T*Bp, 2H] f32 scratch

    H2 = 2 * H            # fused hidden width  [h_scene | h_desc]
    G = 4 * H2            # fused gate width (gate-grouped: i | f | g | o)

    # Lane mask selecting the g-gate block (tanh) vs the sigmoid gates; hoisted.
    lane = lax.broadcasted_iota(jnp.int32, (Bp, G), 1)
    g_mask = (lane >= 2 * H2) & (lane < 3 * H2)

    h = jnp.zeros((Bp, H2), jnp.float32)
    for layer in range(num_layers):                   # unrolled at trace time
        w_ih = lw[3 * layer][...]                     # bf16 [Din_l, 8H]
        w_hh = lw[3 * layer + 1][...]                 # bf16 [2H, 8H]
        b = lw[3 * layer + 2][...]                    # f32  [1, 8H]  (b_ih + b_hh)

        xin = x_ref[...] if layer == 0 else seq_ref[...]     # [T*Bp, Din_l]
        # Hoisted input projection: one matmul for all timesteps of this layer.
        proj = jnp.dot(xin.astype(MXU_DTYPE), w_ih,
                       preferred_element_type=jnp.float32) + b   # [T*Bp, 8H]

        h = jnp.zeros((Bp, H2), jnp.float32)
        c = jnp.zeros((Bp, H2), jnp.float32)
        for t in range(T):                            # static unroll (T small)
            gates = proj[t * Bp:(t + 1) * Bp, :] + jnp.dot(
                h.astype(MXU_DTYPE), w_hh, preferred_element_type=jnp.float32)
            # Full-vreg activation + lane select instead of 8 narrow slices.
            act = jnp.where(g_mask, jnp.tanh(gates), jax.nn.sigmoid(gates))
            i_g = act[:, 0:H2]
            f_g = act[:, H2:2 * H2]
            g_g = act[:, 2 * H2:3 * H2]
            o_g = act[:, 3 * H2:4 * H2]
            c = f_g * c + i_g * g_g
            h = o_g * jnp.tanh(c)
            if layer < num_layers - 1:                # last layer: never read
                seq_ref[pl.ds(t * Bp, Bp), :] = h

    # Fused MLP head on h = [h_scene | h_desc]  (matches torch.cat order).
    z1 = jnp.dot(h.astype(MXU_DTYPE), w1_ref[...],
                 preferred_element_type=jnp.float32) + b1_ref[...]
    z1 = jnp.maximum(z1, 0.0)
    z2 = jnp.dot(z1.astype(MXU_DTYPE), w2_ref[...],
                 preferred_element_type=jnp.float32) + b2_ref[...]
    out_ref[...] = jax.nn.sigmoid(z2)                 # lane-dense [Bp, 128] store


# -----------------------------------------------------------------------------
# Wrapper: weight fusion (block-diagonal, gate-grouped) + padding + pallas_call
# -----------------------------------------------------------------------------
def _fuse_gate_cols(w_s, w_d, H):
    """[Ds,4H],[Dd,4H] -> [Ds+Dd, 8H] block-diag with columns grouped by gate."""
    Ds, Dd = w_s.shape[0], w_d.shape[0]
    out = jnp.zeros((Ds + Dd, 8 * H), jnp.float32)
    for k in range(4):
        out = out.at[:Ds, k * 2 * H:k * 2 * H + H].set(w_s[:, k * H:(k + 1) * H])
        out = out.at[Ds:, k * 2 * H + H:(k + 1) * 2 * H].set(w_d[:, k * H:(k + 1) * H])
    return out


def _fuse_bias(b_s, b_d, H):
    parts = []
    for k in range(4):
        parts.append(b_s[:, k * H:(k + 1) * H])
        parts.append(b_d[:, k * H:(k + 1) * H])
    return jnp.concatenate(parts, axis=1)             # [1, 8H]


def fused_flat_lstm_pallas(scene_btd, desc_btd, scene_params, desc_params, fc_params):
    B, T, Ds = scene_btd.shape
    Dd = desc_btd.shape[-1]
    H = scene_params[0][1].shape[0]                   # w_hh is [H, 4H]
    num_layers = len(scene_params)
    assert len(desc_params) == num_layers
    # TODO(synk): fusion assumes the description seq length equals the trace
    # length (true for this module's config: seq_length == T).
    assert desc_btd.shape[1] == T

    Bp = ((B + 7) // 8) * 8                           # pad batch to sublane tile
    x = jnp.concatenate([scene_btd, desc_btd], axis=-1).astype(jnp.float32)
    x = jnp.pad(x, ((0, Bp - B), (0, 0), (0, 0)))
    # time-major, flattened: row index = t*Bp + b
    x_tb = jnp.transpose(x, (1, 0, 2)).reshape(T * Bp, Ds + Dd).astype(MXU_DTYPE)

    flat = []
    for l in range(num_layers):
        wih_s, whh_s, b_s = scene_params[l]
        wih_d, whh_d, b_d = desc_params[l]
        flat.append(_fuse_gate_cols(wih_s, wih_d, H).astype(MXU_DTYPE))
        flat.append(_fuse_gate_cols(whh_s, whh_d, H).astype(MXU_DTYPE))
        flat.append(_fuse_bias(b_s, b_d, H).astype(jnp.float32))

    w1, b1, w2, b2 = fc_params
    F = w1.shape[1]
    w2p = jnp.zeros((F, OUT_LANES), jnp.float32).at[:, :w2.shape[1]].set(w2)
    b2p = jnp.zeros((1, OUT_LANES), jnp.float32).at[:, :b2.shape[1]].set(b2)
    flat += [w1.astype(MXU_DTYPE), b1.astype(jnp.float32),
             w2p.astype(MXU_DTYPE), b2p]

    vmem = pl.BlockSpec(memory_space=pltpu.MemorySpace.VMEM)
    kernel = functools.partial(_flat_lstm_kernel, num_layers, T, Bp, H)
    out = pl.pallas_call(
        kernel,
        out_shape=jax.ShapeDtypeStruct((Bp, OUT_LANES), jnp.float32),
        in_specs=[vmem] * (1 + 3 * num_layers + 4),
        out_specs=vmem,
        scratch_shapes=[pltpu.VMEM((T * Bp, 2 * H), jnp.float32)],
        compiler_params=pltpu.CompilerParams(vmem_limit_bytes=32 * 1024 * 1024),
    )(x_tb, *flat)
    return out[:B, :1]


# -----------------------------------------------------------------------------
# Parameter construction (deterministic, PyTorch-style U(-1/sqrt(H), 1/sqrt(H)))
# Weights are stored transposed vs. torch: w_ih [D, 4H], w_hh [H, 4H].
# -----------------------------------------------------------------------------
def _uniform(key, shape, k):
    return jax.random.uniform(key, shape, jnp.float32, minval=-k, maxval=k)


def init_lstm_params(key, input_size, hidden_size, num_layers):
    k = 1.0 / math.sqrt(hidden_size)
    layers = []
    for l in range(num_layers):
        d = input_size if l == 0 else hidden_size
        key, k1, k2, k3, k4 = jax.random.split(key, 5)
        w_ih = _uniform(k1, (d, 4 * hidden_size), k)
        w_hh = _uniform(k2, (hidden_size, 4 * hidden_size), k)
        b = (_uniform(k3, (1, 4 * hidden_size), k)
             + _uniform(k4, (1, 4 * hidden_size), k))     # b_ih + b_hh
        layers.append((w_ih, w_hh, b))
    return layers, key


def init_fc_params(key, in_size, ff_size):
    k1 = 1.0 / math.sqrt(in_size)
    k2 = 1.0 / math.sqrt(ff_size)
    key, a, b_, c, d = jax.random.split(key, 5)
    w1 = _uniform(a, (in_size, ff_size), k1)
    b1 = _uniform(b_, (1, ff_size), k1)
    w2 = _uniform(c, (ff_size, 1), k2)
    b2 = _uniform(d, (1, 1), k2)
    return (w1, b1, w2, b2), key


# -----------------------------------------------------------------------------
# FlatLSTM forward (glue in plain JAX, everything hot inside one Pallas kernel)
# -----------------------------------------------------------------------------
def flat_lstm_forward(objs_trace, body_trace, description, params):
    B, T, Nobj, Fobj = objs_trace.shape
    state_trace = jnp.concatenate(
        [objs_trace.reshape(B, T, Nobj * Fobj),
         jnp.squeeze(body_trace, axis=2)], axis=-1)       # [B, T, state_size]
    # TODO(synk): nn.LSTM inter-layer dropout is a no-op at inference; omitted.
    return fused_flat_lstm_pallas(
        state_trace, description,
        params["lstm_scene"], params["lstm"], params["fc"])


if __name__ == "__main__":
    # Module hyper-parameters (small, consistent with the reference forward).
    body_size, obj_size = 4, 4
    state_size = 3 * obj_size + body_size   # 16  (=> Nobj = 3)
    voc_size = 16
    seq_length = 8
    hidden_size = 32
    num_layers = 2

    B, T, Nobj = 2, 8, 3

    key = jax.random.PRNGKey(0)
    k_obj, k_body, k_desc, k_params = jax.random.split(key, 4)

    objs_trace = jax.random.normal(k_obj, (B, T, Nobj, obj_size), jnp.float32)
    body_trace = jax.random.normal(k_body, (B, T, 1, body_size), jnp.float32)
    description = jax.random.normal(k_desc, (B, seq_length, voc_size), jnp.float32)

    lstm_params, k_params = init_lstm_params(k_params, voc_size, hidden_size, num_layers)
    scene_params, k_params = init_lstm_params(k_params, state_size, hidden_size, num_layers)
    fc_params, _ = init_fc_params(k_params, 2 * hidden_size, hidden_size)
    params = {"lstm": lstm_params, "lstm_scene": scene_params, "fc": fc_params}

    out = flat_lstm_forward(objs_trace, body_trace, description, params)
    out = jax.block_until_ready(out)
    assert out.shape == (B, 1)
    assert bool(jnp.all(jnp.isfinite(out)))
    assert bool(jnp.all((out > 0.0) & (out < 1.0)))
    print("KERNEL_OK")
</pallas_src>

<mosaic_0001>
module attributes {stable_mosaic.version = 11 : i64} {
  func.func @_flat_lstm_kernel(%arg0: memref<64x32xbf16, #tpu.memory_space<vmem>>, %arg1: memref<32x256xbf16, #tpu.memory_space<vmem>>, %arg2: memref<64x256xbf16, #tpu.memory_space<vmem>>, %arg3: memref<1x256xf32, #tpu.memory_space<vmem>>, %arg4: memref<64x256xbf16, #tpu.memory_space<vmem>>, %arg5: memref<64x256xbf16, #tpu.memory_space<vmem>>, %arg6: memref<1x256xf32, #tpu.memory_space<vmem>>, %arg7: memref<64x32xbf16, #tpu.memory_space<vmem>>, %arg8: memref<1x32xf32, #tpu.memory_space<vmem>>, %arg9: memref<32x128xbf16, #tpu.memory_space<vmem>>, %arg10: memref<1x128xf32, #tpu.memory_space<vmem>>, %arg11: memref<8x128xf32, #tpu.memory_space<vmem>>, %arg12: memref<64x64xf32, #tpu.memory_space<vmem>>) attributes {dimension_semantics = [], scalar_prefetch = 0 : i64, scratch_operands = 1 : i64, tpu.core_type = #tpu.core_type<tc>} {
    %0 = tpu.iota {dimensions = array<i32: 1>} : vector<8x256xi32>
    %c128_i32 = arith.constant 128 : i32
    %1 = vector.broadcast %c128_i32 : i32 to vector<8x256xi32>
    %2 = arith.cmpi sge, %0, %1 : vector<8x256xi32>
    %c192_i32 = arith.constant 192 : i32
    %3 = vector.broadcast %c192_i32 : i32 to vector<8x256xi32>
    %4 = arith.cmpi slt, %0, %3 : vector<8x256xi32>
    %5 = arith.andi %2, %4 : vector<8x256xi1>
    %c0 = arith.constant 0 : index
    %c0_0 = arith.constant 0 : index
    %6 = vector.load %arg1[%c0, %c0_0] : memref<32x256xbf16, #tpu.memory_space<vmem>>, vector<32x256xbf16>
    %c0_1 = arith.constant 0 : index
    %c0_2 = arith.constant 0 : index
    %7 = vector.load %arg2[%c0_1, %c0_2] : memref<64x256xbf16, #tpu.memory_space<vmem>>, vector<64x256xbf16>
    %c0_3 = arith.constant 0 : index
    %c0_4 = arith.constant 0 : index
    %8 = vector.load %arg3[%c0_3, %c0_4] : memref<1x256xf32, #tpu.memory_space<vmem>>, vector<1x256xf32>
    %c0_5 = arith.constant 0 : index
    %c0_6 = arith.constant 0 : index
    %9 = vector.load %arg0[%c0_5, %c0_6] : memref<64x32xbf16, #tpu.memory_space<vmem>>, vector<64x32xbf16>
    %cst = arith.constant dense<0.000000e+00> : vector<64x256xf32>
    %10 = tpu.matmul %9, %6, %cst {dimension_numbers = #tpu.dot_dimension_numbers<[1], [0], [0], [1], [0, 0, 1, 1], [], []>} : vector<64x32xbf16>, vector<32x256xbf16>, vector<64x256xf32> -> vector<64x256xf32>
    %11 = vector.broadcast %8 : vector<1x256xf32> to vector<64x256xf32>
    %12 = arith.addf %10, %11 : vector<64x256xf32>
    %cst_7 = arith.constant 0.000000e+00 : f32
    %13 = vector.broadcast %cst_7 : f32 to vector<8x64xf32>
    %cst_8 = arith.constant 0.000000e+00 : f32
    %14 = vector.broadcast %cst_8 : f32 to vector<8x64xf32>
    %15 = vector.extract_strided_slice %12 {offsets = [0, 0], sizes = [8, 256], strides = [1, 1]} : vector<64x256xf32> to vector<8x256xf32>
    %16 = arith.truncf %13 : vector<8x64xf32> to vector<8x64xbf16>
    %cst_9 = arith.constant dense<0.000000e+00> : vector<8x256xf32>
    %17 = tpu.matmul %16, %7, %cst_9 {dimension_numbers = #tpu.dot_dimension_numbers<[1], [0], [0], [1], [0, 0, 1, 1], [], []>} : vector<8x64xbf16>, vector<64x256xbf16>, vector<8x256xf32> -> vector<8x256xf32>
    %18 = arith.addf %15, %17 : vector<8x256xf32>
    %19 = math.tanh %18 : vector<8x256xf32>
    %20 = arith.negf %18 : vector<8x256xf32>
    %21 = math.exp %20 : vector<8x256xf32>
    %cst_10 = arith.constant 1.000000e+00 : f32
    %22 = vector.broadcast %cst_10 : f32 to vector<8x256xf32>
    %23 = arith.addf %22, %21 : vector<8x256xf32>
    %24 = arith.divf %22, %23 : vector<8x256xf32>
    %25 = arith.select %5, %19, %24 : vector<8x256xi1>, vector<8x256xf32>
    %26 = vector.extract_strided_slice %25 {offsets = [0, 0], sizes = [8, 64], strides = [1, 1]} : vector<8x256xf32> to vector<8x64xf32>
    %27 = vector.extract_strided_slice %25 {offsets = [0, 64], sizes = [8, 64], strides = [1, 1]} : vector<8x256xf32> to vector<8x64xf32>
    %28 = vector.extract_strided_slice %25 {offsets = [0, 128], sizes = [8, 64], strides = [1, 1]} : vector<8x256xf32> to vector<8x64xf32>
    %29 = vector.extract_strided_slice %25 {offsets = [0, 192], sizes = [8, 64], strides = [1, 1]} : vector<8x256xf32> to vector<8x64xf32>
    %30 = arith.mulf %27, %14 : vector<8x64xf32>
    %31 = arith.mulf %26, %28 : vector<8x64xf32>
    %32 = arith.addf %30, %31 : vector<8x64xf32>
    %33 = math.tanh %32 : vector<8x64xf32>
    %34 = arith.mulf %29, %33 : vector<8x64xf32>
    %c0_11 = arith.constant 0 : index
    %c0_12 = arith.constant 0 : index
    %35 = vector.load %arg12[%c0_11, %c0_12] : memref<64x64xf32, #tpu.memory_space<vmem>>, vector<8x64xf32>
    tpu.vector_store %arg12[%c0_11, %c0_12], %34 {strides = array<i32>} : memref<64x64xf32, #tpu.memory_space<vmem>>, vector<8x64xf32>,
    %36 = vector.extract_strided_slice %12 {offsets = [8, 0], sizes = [8, 256], strides = [1, 1]} : vector<64x256xf32> to vector<8x256xf32>
    %37 = arith.truncf %34 : vector<8x64xf32> to vector<8x64xbf16>
    %cst_13 = arith.constant dense<0.000000e+00> : vector<8x256xf32>
    %38 = tpu.matmul %37, %7, %cst_13 {dimension_numbers = #tpu.dot_dimension_numbers<[1], [0], [0], [1], [0, 0, 1, 1], [], []>} : vector<8x64xbf16>, vector<64x256xbf16>, vector<8x256xf32> -> vector<8x256xf32>
    %39 = arith.addf %36, %38 : vector<8x256xf32>
    %40 = math.tanh %39 : vector<8x256xf32>
    %41 = arith.negf %39 : vector<8x256xf32>
    %42 = math.exp %41 : vector<8x256xf32>
    %cst_14 = arith.constant 1.000000e+00 : f32
    %43 = vector.broadcast %cst_14 : f32 to vector<8x256xf32>
    %44 = arith.addf %43, %42 : vector<8x256xf32>
    %45 = arith.divf %43, %44 : vector<8x256xf32>
    %46 = arith.select %5, %40, %45 : vector<8x256xi1>, vector<8x256xf32>
    %47 = vector.extract_strided_slice %46 {offsets = [0, 0], sizes = [8, 64], strides = [1, 1]} : vector<8x256xf32> to vector<8x64xf32>
    %48 = vector.extract_strided_slice %46 {offsets = [0, 64], sizes = [8, 64], strides = [1, 1]} : vector<8x256xf32> to vector<8x64xf32>
    %49 = vector.extract_strided_slice %46 {offsets = [0, 128], sizes = [8, 64], strides = [1, 1]} : vector<8x256xf32> to vector<8x64xf32>
    %50 = vector.extract_strided_slice %46 {offsets = [0, 192], sizes = [8, 64], strides = [1, 1]} : vector<8x256xf32> to vector<8x64xf32>
    %51 = arith.mulf %48, %32 : vector<8x64xf32>
    %52 = arith.mulf %47, %49 : vector<8x64xf32>
    %53 = arith.addf %51, %52 : vector<8x64xf32>
    %54 = math.tanh %53 : vector<8x64xf32>
    %55 = arith.mulf %50, %54 : vector<8x64xf32>
    %c8 = arith.constant 8 : index
    %c0_15 = arith.constant 0 : index
    %56 = vector.load %arg12[%c8, %c0_15] : memref<64x64xf32, #tpu.memory_space<vmem>>, vector<8x64xf32>
    tpu.vector_store %arg12[%c8, %c0_15], %55 {strides = array<i32>} : memref<64x64xf32, #tpu.memory_space<vmem>>, vector<8x64xf32>,
    %57 = vector.extract_strided_slice %12 {offsets = [16, 0], sizes = [8, 256], strides = [1, 1]} : vector<64x256xf32> to vector<8x256xf32>
    %58 = arith.truncf %55 : vector<8x64xf32> to vector<8x64xbf16>
    %cst_16 = arith.constant dense<0.000000e+00> : vector<8x256xf32>
    %59 = tpu.matmul %58, %7, %cst_16 {dimension_numbers = #tpu.dot_dimension_numbers<[1], [0], [0], [1], [0, 0, 1, 1], [], []>} : vector<8x64xbf16>, vector<64x256xbf16>, vector<8x256xf32> -> vector<8x256xf32>
    %60 = arith.addf %57, %59 : vector<8x256xf32>
    %61 = math.tanh %60 : vector<8x256xf32>
    %62 = arith.negf %60 : vector<8x256xf32>
    %63 = math.exp %62 : vector<8x256xf32>
    %cst_17 = arith.constant 1.000000e+00 : f32
    %64 = vector.broadcast %cst_17 : f32 to vector<8x256xf32>
    %65 = arith.addf %64, %63 : vector<8x256xf32>
    %66 = arith.divf %64, %65 : vector<8x256xf32>
    %67 = arith.select %5, %61, %66 : vector<8x256xi1>, vector<8x256xf32>
    %68 = vector.extract_strided_slice %67 {offsets = [0, 0], sizes = [8, 64], strides = [1, 1]} : vector<8x256xf32> to vector<8x64xf32>
    %69 = vector.extract_strided_slice %67 {offsets = [0, 64], sizes = [8, 64], strides = [1, 1]} : vector<8x256xf32> to vector<8x64xf32>
    %70 = vector.extract_strided_slice %67 {offsets = [0, 128], sizes = [8, 64], strides = [1, 1]} : vector<8x256xf32> to vector<8x64xf32>
    %71 = vector.extract_strided_slice %67 {offsets = [0, 192], sizes = [8, 64], strides = [1, 1]} : vector<8x256xf32> to vector<8x64xf32>
    %72 = arith.mulf %69, %53 : vector<8x64xf32>
    %73 = arith.mulf %68, %70 : vector<8x64xf32>
    %74 = arith.addf %72, %73 : vector<8x64xf32>
    %75 = math.tanh %74 : vector<8x64xf32>
    %76 = arith.mulf %71, %75 : vector<8x64xf32>
    %c16 = arith.constant 16 : index
    %c0_18 = arith.constant 0 : index
    %77 = vector.load %arg12[%c16, %c0_18] : memref<64x64xf32, #tpu.memory_space<vmem>>, vector<8x64xf32>
    tpu.vector_store %arg12[%c16, %c0_18], %76 {strides = array<i32>} : memref<64x64xf32, #tpu.memory_space<vmem>>, vector<8x64xf32>,
    %78 = vector.extract_strided_slice %12 {offsets = [24, 0], sizes = [8, 256], strides = [1, 1]} : vector<64x256xf32> to vector<8x256xf32>
    %79 = arith.truncf %76 : vector<8x64xf32> to vector<8x64xbf16>
    %cst_19 = arith.constant dense<0.000000e+00> : vector<8x256xf32>
    %80 = tpu.matmul %79, %7, %cst_19 {dimension_numbers = #tpu.dot_dimension_numbers<[1], [0], [0], [1], [0, 0, 1, 1], [], []>} : vector<8x64xbf16>, vector<64x256xbf16>, vector<8x256xf32> -> vector<8x256xf32>
    %81 = arith.addf %78, %80 : vector<8x256xf32>
    %82 = math.tanh %81 : vector<8x256xf32>
    %83 = arith.negf %81 : vector<8x256xf32>
    %84 = math.exp %83 : vector<8x256xf32>
    %cst_20 = arith.constant 1.000000e+00 : f32
    %85 = vector.broadcast %cst_20 : f32 to vector<8x256xf32>
    %86 = arith.addf %85, %84 : vector<8x256xf32>
    %87 = arith.divf %85, %86 : vector<8x256xf32>
    %88 = arith.select %5, %82, %87 : vector<8x256xi1>, vector<8x256xf32>
    %89 = vector.extract_strided_slice %88 {offsets = [0, 0], sizes = [8, 64], strides = [1, 1]} : vector<8x256xf32> to vector<8x64xf32>
    %90 = vector.extract_strided_slice %88 {offsets = [0, 64], sizes = [8, 64], strides = [1, 1]} : vector<8x256xf32> to vector<8x64xf32>
    %91 = vector.extract_strided_slice %88 {offsets = [0, 128], sizes = [8, 64], strides = [1, 1]} : vector<8x256xf32> to vector<8x64xf32>
    %92 = vector.extract_strided_slice %88 {offsets = [0, 192], sizes = [8, 64], strides = [1, 1]} : vector<8x256xf32> to vector<8x64xf32>
    %93 = arith.mulf %90, %74 : vector<8x64xf32>
    %94 = arith.mulf %89, %91 : vector<8x64xf32>
    %95 = arith.addf %93, %94 : vector<8x64xf32>
    %96 = math.tanh %95 : vector<8x64xf32>
    %97 = arith.mulf %92, %96 : vector<8x64xf32>
    %c24 = arith.constant 24 : index
    %c0_21 = arith.constant 0 : index
    %98 = vector.load %arg12[%c24, %c0_21] : memref<64x64xf32, #tpu.memory_space<vmem>>, vector<8x64xf32>
    tpu.vector_store %arg12[%c24, %c0_21], %97 {strides = array<i32>} : memref<64x64xf32, #tpu.memory_space<vmem>>, vector<8x64xf32>,
    %99 = vector.extract_strided_slice %12 {offsets = [32, 0], sizes = [8, 256], strides = [1, 1]} : vector<64x256xf32> to vector<8x256xf32>
    %100 = arith.truncf %97 : vector<8x64xf32> to vector<8x64xbf16>
    %cst_22 = arith.constant dense<0.000000e+00> : vector<8x256xf32>
    %101 = tpu.matmul %100, %7, %cst_22 {dimension_numbers = #tpu.dot_dimension_numbers<[1], [0], [0], [1], [0, 0, 1, 1], [], []>} : vector<8x64xbf16>, vector<64x256xbf16>, vector<8x256xf32> -> vector<8x256xf32>
    %102 = arith.addf %99, %101 : vector<8x256xf32>
    %103 = math.tanh %102 : vector<8x256xf32>
    %104 = arith.negf %102 : vector<8x256xf32>
    %105 = math.exp %104 : vector<8x256xf32>
    %cst_23 = arith.constant 1.000000e+00 : f32
    %106 = vector.broadcast %cst_23 : f32 to vector<8x256xf32>
    %107 = arith.addf %106, %105 : vector<8x256xf32>
    %108 = arith.divf %106, %107 : vector<8x256xf32>
    %109 = arith.select %5, %103, %108 : vector<8x256xi1>, vector<8x256xf32>
    %110 = vector.extract_strided_slice %109 {offsets = [0, 0], sizes = [8, 64], strides = [1, 1]} : vector<8x256xf32> to vector<8x64xf32>
    %111 = vector.extract_strided_slice %109 {offsets = [0, 64], sizes = [8, 64], strides = [1, 1]} : vector<8x256xf32> to vector<8x64xf32>
    %112 = vector.extract_strided_slice %109 {offsets = [0, 128], sizes = [8, 64], strides = [1, 1]} : vector<8x256xf32> to vector<8x64xf32>
    %113 = vector.extract_strided_slice %109 {offsets = [0, 192], sizes = [8, 64], strides = [1, 1]} : vector<8x256xf32> to vector<8x64xf32>
    %114 = arith.mulf %111, %95 : vector<8x64xf32>
    %115 = arith.mulf %110, %112 : vector<8x64xf32>
    %116 = arith.addf %114, %115 : vector<8x64xf32>
    %117 = math.tanh %116 : vector<8x64xf32>
    %118 = arith.mulf %113, %117 : vector<8x64xf32>
    %c32 = arith.constant 32 : index
    %c0_24 = arith.constant 0 : index
    %119 = vector.load %arg12[%c32, %c0_24] : memref<64x64xf32, #tpu.memory_space<vmem>>, vector<8x64xf32>
    tpu.vector_store %arg12[%c32, %c0_24], %118 {strides = array<i32>} : memref<64x64xf32, #tpu.memory_space<vmem>>, vector<8x64xf32>,
    %120 = vector.extract_strided_slice %12 {offsets = [40, 0], sizes = [8, 256], strides = [1, 1]} : vector<64x256xf32> to vector<8x256xf32>
    %121 = arith.truncf %118 : vector<8x64xf32> to vector<8x64xbf16>
    %cst_25 = arith.constant dense<0.000000e+00> : vector<8x256xf32>
    %122 = tpu.matmul %121, %7, %cst_25 {dimension_numbers = #tpu.dot_dimension_numbers<[1], [0], [0], [1], [0, 0, 1, 1], [], []>} : vector<8x64xbf16>, vector<64x256xbf16>, vector<8x256xf32> -> vector<8x256xf32>
    %123 = arith.addf %120, %122 : vector<8x256xf32>
    %124 = math.tanh %123 : vector<8x256xf32>
    %125 = arith.negf %123 : vector<8x256xf32>
    %126 = math.exp %125 : vector<8x256xf32>
    %cst_26 = arith.constant 1.000000e+00 : f32
    %127 = vector.broadcast %cst_26 : f32 to vector<8x256xf32>
    %128 = arith.addf %127, %126 : vector<8x256xf32>
    %129 = arith.divf %127, %128 : vector<8x256xf32>
    %130 = arith.select %5, %124, %129 : vector<8x256xi1>, vector<8x256xf32>
    %131 = vector.extract_strided_slice %130 {offsets = [0, 0], sizes = [8, 64], strides = [1, 1]} : vector<8x256xf32> to vector<8x64xf32>
    %132 = vector.extract_strided_slice %130 {offsets = [0, 64], sizes = [8, 64], strides = [1, 1]} : vector<8x256xf32> to vector<8x64xf32>
    %133 = vector.extract_strided_slice %130 {offsets = [0, 128], sizes = [8, 64], strides = [1, 1]} : vector<8x256xf32> to vector<8x64xf32>
    %134 = vector.extract_strided_slice %130 {offsets = [0, 192], sizes = [8, 64], strides = [1, 1]} : vector<8x256xf32> to vector<8x64xf32>
    %135 = arith.mulf %132, %116 : vector<8x64xf32>
    %136 = arith.mulf %131, %133 : vector<8x64xf32>
    %137 = arith.addf %135, %136 : vector<8x64xf32>
    %138 = math.tanh %137 : vector<8x64xf32>
    %139 = arith.mulf %134, %138 : vector<8x64xf32>
    %c40 = arith.constant 40 : index
    %c0_27 = arith.constant 0 : index
    %140 = vector.load %arg12[%c40, %c0_27] : memref<64x64xf32, #tpu.memory_space<vmem>>, vector<8x64xf32>
    tpu.vector_store %arg12[%c40, %c0_27], %139 {strides = array<i32>} : memref<64x64xf32, #tpu.memory_space<vmem>>, vector<8x64xf32>,
    %141 = vector.extract_strided_slice %12 {offsets = [48, 0], sizes = [8, 256], strides = [1, 1]} : vector<64x256xf32> to vector<8x256xf32>
    %142 = arith.truncf %139 : vector<8x64xf32> to vector<8x64xbf16>
    %cst_28 = arith.constant dense<0.000000e+00> : vector<8x256xf32>
    %143 = tpu.matmul %142, %7, %cst_28 {dimension_numbers = #tpu.dot_dimension_numbers<[1], [0], [0], [1], [0, 0, 1, 1], [], []>} : vector<8x64xbf16>, vector<64x256xbf16>, vector<8x256xf32> -> vector<8x256xf32>
    %144 = arith.addf %141, %143 : vector<8x256xf32>
    %145 = math.tanh %144 : vector<8x256xf32>
    %146 = arith.negf %144 : vector<8x256xf32>
    %147 = math.exp %146 : vector<8x256xf32>
    %cst_29 = arith.constant 1.000000e+00 : f32
    %148 = vector.broadcast %cst_29 : f32 to vector<8x256xf32>
    %149 = arith.addf %148, %147 : vector<8x256xf32>
    %150 = arith.divf %148, %149 : vector<8x256xf32>
    %151 = arith.select %5, %145, %150 : vector<8x256xi1>, vector<8x256xf32>
    %152 = vector.extract_strided_slice %151 {offsets = [0, 0], sizes = [8, 64], strides = [1, 1]} : vector<8x256xf32> to vector<8x64xf32>
    %153 = vector.extract_strided_slice %151 {offsets = [0, 64], sizes = [8, 64], strides = [1, 1]} : vector<8x256xf32> to vector<8x64xf32>
    %154 = vector.extract_strided_slice %151 {offsets = [0, 128], sizes = [8, 64], strides = [1, 1]} : vector<8x256xf32> to vector<8x64xf32>
    %155 = vector.extract_strided_slice %151 {offsets = [0, 192], sizes = [8, 64], strides = [1, 1]} : vector<8x256xf32> to vector<8x64xf32>
    %156 = arith.mulf %153, %137 : vector<8x64xf32>
    %157 = arith.mulf %152, %154 : vector<8x64xf32>
    %158 = arith.addf %156, %157 : vector<8x64xf32>
    %159 = math.tanh %158 : vector<8x64xf32>
    %160 = arith.mulf %155, %159 : vector<8x64xf32>
    %c48 = arith.constant 48 : index
    %c0_30 = arith.constant 0 : index
    %161 = vector.load %arg12[%c48, %c0_30] : memref<64x64xf32, #tpu.memory_space<vmem>>, vector<8x64xf32>
    tpu.vector_store %arg12[%c48, %c0_30], %160 {strides = array<i32>} : memref<64x64xf32, #tpu.memory_space<vmem>>, vector<8x64xf32>,
    %162 = vector.extract_strided_slice %12 {offsets = [56, 0], sizes = [8, 256], strides = [1, 1]} : vector<64x256xf32> to vector<8x256xf32>
    %163 = arith.truncf %160 : vector<8x64xf32> to vector<8x64xbf16>
    %cst_31 = arith.constant dense<0.000000e+00> : vector<8x256xf32>
    %164 = tpu.matmul %163, %7, %cst_31 {dimension_numbers = #tpu.dot_dimension_numbers<[1], [0], [0], [1], [0, 0, 1, 1], [], []>} : vector<8x64xbf16>, vector<64x256xbf16>, vector<8x256xf32> -> vector<8x256xf32>
    %165 = arith.addf %162, %164 : vector<8x256xf32>
    %166 = math.tanh %165 : vector<8x256xf32>
    %167 = arith.negf %165 : vector<8x256xf32>
    %168 = math.exp %167 : vector<8x256xf32>
    %cst_32 = arith.constant 1.000000e+00 : f32
    %169 = vector.broadcast %cst_32 : f32 to vector<8x256xf32>
    %170 = arith.addf %169, %168 : vector<8x256xf32>
    %171 = arith.divf %169, %170 : vector<8x256xf32>
    %172 = arith.select %5, %166, %171 : vector<8x256xi1>, vector<8x256xf32>
    %173 = vector.extract_strided_slice %172 {offsets = [0, 0], sizes = [8, 64], strides = [1, 1]} : vector<8x256xf32> to vector<8x64xf32>
    %174 = vector.extract_strided_slice %172 {offsets = [0, 64], sizes = [8, 64], strides = [1, 1]} : vector<8x256xf32> to vector<8x64xf32>
    %175 = vector.extract_strided_slice %172 {offsets = [0, 128], sizes = [8, 64], strides = [1, 1]} : vector<8x256xf32> to vector<8x64xf32>
    %176 = vector.extract_strided_slice %172 {offsets = [0, 192], sizes = [8, 64], strides = [1, 1]} : vector<8x256xf32> to vector<8x64xf32>
    %177 = arith.mulf %174, %158 : vector<8x64xf32>
    %178 = arith.mulf %173, %175 : vector<8x64xf32>
    %179 = arith.addf %177, %178 : vector<8x64xf32>
    %180 = math.tanh %179 : vector<8x64xf32>
    %181 = arith.mulf %176, %180 : vector<8x64xf32>
    %c56 = arith.constant 56 : index
    %c0_33 = arith.constant 0 : index
    %182 = vector.load %arg12[%c56, %c0_33] : memref<64x64xf32, #tpu.memory_space<vmem>>, vector<8x64xf32>
    tpu.vector_store %arg12[%c56, %c0_33], %181 {strides = array<i32>} : memref<64x64xf32, #tpu.memory_space<vmem>>, vector<8x64xf32>,
    %c0_34 = arith.constant 0 : index
    %c0_35 = arith.constant 0 : index
    %183 = vector.load %arg4[%c0_34, %c0_35] : memref<64x256xbf16, #tpu.memory_space<vmem>>, vector<64x256xbf16>
    %c0_36 = arith.constant 0 : index
    %c0_37 = arith.constant 0 : index
    %184 = vector.load %arg5[%c0_36, %c0_37] : memref<64x256xbf16, #tpu.memory_space<vmem>>, vector<64x256xbf16>
    %c0_38 = arith.constant 0 : index
    %c0_39 = arith.constant 0 : index
    %185 = vector.load %arg6[%c0_38, %c0_39] : memref<1x256xf32, #tpu.memory_space<vmem>>, vector<1x256xf32>
    %c0_40 = arith.constant 0 : index
    %c0_41 = arith.constant 0 : index
    %186 = vector.load %arg12[%c0_40, %c0_41] : memref<64x64xf32, #tpu.memory_space<vmem>>, vector<64x64xf32>
    %187 = arith.truncf %186 : vector<64x64xf32> to vector<64x64xbf16>
    %cst_42 = arith.constant dense<0.000000e+00> : vector<64x256xf32>
    %188 = tpu.matmul %187, %183, %cst_42 {dimension_numbers = #tpu.dot_dimension_numbers<[1], [0], [0], [1], [0, 0, 1, 1], [], []>} : vector<64x64xbf16>, vector<64x256xbf16>, vector<64x256xf32> -> vector<64x256xf32>
    %189 = vector.broadcast %185 : vector<1x256xf32> to vector<64x256xf32>
    %190 = arith.addf %188, %189 : vector<64x256xf32>
    %cst_43 = arith.constant 0.000000e+00 : f32
    %191 = vector.broadcast %cst_43 : f32 to vector<8x64xf32>
    %cst_44 = arith.constant 0.000000e+00 : f32
    %192 = vector.broadcast %cst_44 : f32 to vector<8x64xf32>
    %193 = vector.extract_strided_slice %190 {offsets = [0, 0], sizes = [8, 256], strides = [1, 1]} : vector<64x256xf32> to vector<8x256xf32>
    %194 = arith.truncf %191 : vector<8x64xf32> to vector<8x64xbf16>
    %cst_45 = arith.constant dense<0.000000e+00> : vector<8x256xf32>
    %195 = tpu.matmul %194, %184, %cst_45 {dimension_numbers = #tpu.dot_dimension_numbers<[1], [0], [0], [1], [0, 0, 1, 1], [], []>} : vector<8x64xbf16>, vector<64x256xbf16>, vector<8x256xf32> -> vector<8x256xf32>
    %196 = arith.addf %193, %195 : vector<8x256xf32>
    %197 = math.tanh %196 : vector<8x256xf32>
    %198 = arith.negf %196 : vector<8x256xf32>
    %199 = math.exp %198 : vector<8x256xf32>
    %cst_46 = arith.constant 1.000000e+00 : f32
    %200 = vector.broadcast %cst_46 : f32 to vector<8x256xf32>
    %201 = arith.addf %200, %199 : vector<8x256xf32>
    %202 = arith.divf %200, %201 : vector<8x256xf32>
    %203 = arith.select %5, %197, %202 : vector<8x256xi1>, vector<8x256xf32>
    %204 = vector.extract_strided_slice %203 {offsets = [0, 0], sizes = [8, 64], strides = [1, 1]} : vector<8x256xf32> to vector<8x64xf32>
    %205 = vector.extract_strided_slice %203 {offsets = [0, 64], sizes = [8, 64], strides = [1, 1]} : vector<8x256xf32> to vector<8x64xf32>
    %206 = vector.extract_strided_slice %203 {offsets = [0, 128], sizes = [8, 64], strides = [1, 1]} : vector<8x256xf32> to vector<8x64xf32>
    %207 = vector.extract_strided_slice %203 {offsets = [0, 192], sizes = [8, 64], strides = [1, 1]} : vector<8x256xf32> to vector<8x64xf32>
    %208 = arith.mulf %205, %192 : vector<8x64xf32>
    %209 = arith.mulf %204, %206 : vector<8x64xf32>
    %210 = arith.addf %208, %209 : vector<8x64xf32>
    %211 = math.tanh %210 : vector<8x64xf32>
    %212 = arith.mulf %207, %211 : vector<8x64xf32>
    %213 = vector.extract_strided_slice %190 {offsets = [8, 0], sizes = [8, 256], strides = [1, 1]} : vector<64x256xf32> to vector<8x256xf32>
    %214 = arith.truncf %212 : vector<8x64xf32> to vector<8x64xbf16>
    %cst_47 = arith.constant dense<0.000000e+00> : vector<8x256xf32>
    %215 = tpu.matmul %214, %184, %cst_47 {dimension_numbers = #tpu.dot_dimension_numbers<[1], [0], [0], [1], [0, 0, 1, 1], [], []>} : vector<8x64xbf16>, vector<64x256xbf16>, vector<8x256xf32> -> vector<8x256xf32>
    %216 = arith.addf %213, %215 : vector<8x256xf32>
    %217 = math.tanh %216 : vector<8x256xf32>
    %218 = arith.negf %216 : vector<8x256xf32>
    %219 = math.exp %218 : vector<8x256xf32>
    %cst_48 = arith.constant 1.000000e+00 : f32
    %220 = vector.broadcast %cst_48 : f32 to vector<8x256xf32>
    %221 = arith.addf %220, %219 : vector<8x256xf32>
    %222 = arith.divf %220, %221 : vector<8x256xf32>
    %223 = arith.select %5, %217, %222 : vector<8x256xi1>, vector<8x256xf32>
    %224 = vector.extract_strided_slice %223 {offsets = [0, 0], sizes = [8, 64], strides = [1, 1]} : vector<8x256xf32> to vector<8x64xf32>
    %225 = vector.extract_strided_slice %223 {offsets = [0, 64], sizes = [8, 64], strides = [1, 1]} : vector<8x256xf32> to vector<8x64xf32>
    %226 = vector.extract_strided_slice %223 {offsets = [0, 128], sizes = [8, 64], strides = [1, 1]} : vector<8x256xf32> to vector<8x64xf32>
    %227 = vector.extract_strided_slice %223 {offsets = [0, 192], sizes = [8, 64], strides = [1, 1]} : vector<8x256xf32> to vector<8x64xf32>
    %228 = arith.mulf %225, %210 : vector<8x64xf32>
    %229 = arith.mulf %224, %226 : vector<8x64xf32>
    %230 = arith.addf %228, %229 : vector<8x64xf32>
    %231 = math.tanh %230 : vector<8x64xf32>
    %232 = arith.mulf %227, %231 : vector<8x64xf32>
    %233 = vector.extract_strided_slice %190 {offsets = [16, 0], sizes = [8, 256], strides = [1, 1]} : vector<64x256xf32> to vector<8x256xf32>
    %234 = arith.truncf %232 : vector<8x64xf32> to vector<8x64xbf16>
    %cst_49 = arith.constant dense<0.000000e+00> : vector<8x256xf32>
    %235 = tpu.matmul %234, %184, %cst_49 {dimension_numbers = #tpu.dot_dimension_numbers<[1], [0], [0], [1], [0, 0, 1, 1], [], []>} : vector<8x64xbf16>, vector<64x256xbf16>, vector<8x256xf32> -> vector<8x256xf32>
    %236 = arith.addf %233, %235 : vector<8x256xf32>
    %237 = math.tanh %236 : vector<8x256xf32>
    %238 = arith.negf %236 : vector<8x256xf32>
    %239 = math.exp %238 : vector<8x256xf32>
    %cst_50 = arith.constant 1.000000e+00 : f32
    %240 = vector.broadcast %cst_50 : f32 to vector<8x256xf32>
    %241 = arith.addf %240, %239 : vector<8x256xf32>
    %242 = arith.divf %240, %241 : vector<8x256xf32>
    %243 = arith.select %5, %237, %242 : vector<8x256xi1>, vector<8x256xf32>
    %244 = vector.extract_strided_slice %243 {offsets = [0, 0], sizes = [8, 64], strides = [1, 1]} : vector<8x256xf32> to vector<8x64xf32>
    %245 = vector.extract_strided_slice %243 {offsets = [0, 64], sizes = [8, 64], strides = [1, 1]} : vector<8x256xf32> to vector<8x64xf32>
    %246 = vector.extract_strided_slice %243 {offsets = [0, 128], sizes = [8, 64], strides = [1, 1]} : vector<8x256xf32> to vector<8x64xf32>
    %247 = vector.extract_strided_slice %243 {offsets = [0, 192], sizes = [8, 64], strides = [1, 1]} : vector<8x256xf32> to vector<8x64xf32>
    %248 = arith.mulf %245, %230 : vector<8x64xf32>
    %249 = arith.mulf %244, %246 : vector<8x64xf32>
    %250 = arith.addf %248, %249 : vector<8x64xf32>
    %251 = math.tanh %250 : vector<8x64xf32>
    %252 = arith.mulf %247, %251 : vector<8x64xf32>
    %253 = vector.extract_strided_slice %190 {offsets = [24, 0], sizes = [8, 256], strides = [1, 1]} : vector<64x256xf32> to vector<8x256xf32>
    %254 = arith.truncf %252 : vector<8x64xf32> to vector<8x64xbf16>
    %cst_51 = arith.constant dense<0.000000e+00> : vector<8x256xf32>
    %255 = tpu.matmul %254, %184, %cst_51 {dimension_numbers = #tpu.dot_dimension_numbers<[1], [0], [0], [1], [0, 0, 1, 1], [], []>} : vector<8x64xbf16>, vector<64x256xbf16>, vector<8x256xf32> -> vector<8x256xf32>
    %256 = arith.addf %253, %255 : vector<8x256xf32>
    %257 = math.tanh %256 : vector<8x256xf32>
    %258 = arith.negf %256 : vector<8x256xf32>
    %259 = math.exp %258 : vector<8x256xf32>
    %cst_52 = arith.constant 1.000000e+00 : f32
    %260 = vector.broadcast %cst_52 : f32 to vector<8x256xf32>
    %261 = arith.addf %260, %259 : vector<8x256xf32>
    %262 = arith.divf %260, %261 : vector<8x256xf32>
    %263 = arith.select %5, %257, %262 : vector<8x256xi1>, vector<8x256xf32>
    %264 = vector.extract_strided_slice %263 {offsets = [0, 0], sizes = [8, 64], strides = [1, 1]} : vector<8x256xf32> to vector<8x64xf32>
    %265 = vector.extract_strided_slice %263 {offsets = [0, 64], sizes = [8, 64], strides = [1, 1]} : vector<8x256xf32> to vector<8x64xf32>
    %266 = vector.extract_strided_slice %263 {offsets = [0, 128], sizes = [8, 64], strides = [1, 1]} : vector<8x256xf32> to vector<8x64xf32>
    %267 = vector.extract_strided_slice %263 {offsets = [0, 192], sizes = [8, 64], strides = [1, 1]} : vector<8x256xf32> to vector<8x64xf32>
    %268 = arith.mulf %265, %250 : vector<8x64xf32>
    %269 = arith.mulf %264, %266 : vector<8x64xf32>
    %270 = arith.addf %268, %269 : vector<8x64xf32>
    %271 = math.tanh %270 : vector<8x64xf32>
    %272 = arith.mulf %267, %271 : vector<8x64xf32>
    %273 = vector.extract_strided_slice %190 {offsets = [32, 0], sizes = [8, 256], strides = [1, 1]} : vector<64x256xf32> to vector<8x256xf32>
    %274 = arith.truncf %272 : vector<8x64xf32> to vector<8x64xbf16>
    %cst_53 = arith.constant dense<0.000000e+00> : vector<8x256xf32>
    %275 = tpu.matmul %274, %184, %cst_53 {dimension_numbers = #tpu.dot_dimension_numbers<[1], [0], [0], [1], [0, 0, 1, 1], [], []>} : vector<8x64xbf16>, vector<64x256xbf16>, vector<8x256xf32> -> vector<8x256xf32>
    %276 = arith.addf %273, %275 : vector<8x256xf32>
    %277 = math.tanh %276 : vector<8x256xf32>
    %278 = arith.negf %276 : vector<8x256xf32>
    %279 = math.exp %278 : vector<8x256xf32>
    %cst_54 = arith.constant 1.000000e+00 : f32
    %280 = vector.broadcast %cst_54 : f32 to vector<8x256xf32>
    %281 = arith.addf %280, %279 : vector<8x256xf32>
    %282 = arith.divf %280, %281 : vector<8x256xf32>
    %283 = arith.select %5, %277, %282 : vector<8x256xi1>, vector<8x256xf32>
    %284 = vector.extract_strided_slice %283 {offsets = [0, 0], sizes = [8, 64], strides = [1, 1]} : vector<8x256xf32> to vector<8x64xf32>
    %285 = vector.extract_strided_slice %283 {offsets = [0, 64], sizes = [8, 64], strides = [1, 1]} : vector<8x256xf32> to vector<8x64xf32>
    %286 = vector.extract_strided_slice %283 {offsets = [0, 128], sizes = [8, 64], strides = [1, 1]} : vector<8x256xf32> to vector<8x64xf32>
    %287 = vector.extract_strided_slice %283 {offsets = [0, 192], sizes = [8, 64], strides = [1, 1]} : vector<8x256xf32> to vector<8x64xf32>
    %288 = arith.mulf %285, %270 : vector<8x64xf32>
    %289 = arith.mulf %284, %286 : vector<8x64xf32>
    %290 = arith.addf %288, %289 : vector<8x64xf32>
    %291 = math.tanh %290 : vector<8x64xf32>
    %292 = arith.mulf %287, %291 : vector<8x64xf32>
    %293 = vector.extract_strided_slice %190 {offsets = [40, 0], sizes = [8, 256], strides = [1, 1]} : vector<64x256xf32> to vector<8x256xf32>
    %294 = arith.truncf %292 : vector<8x64xf32> to vector<8x64xbf16>
    %cst_55 = arith.constant dense<0.000000e+00> : vector<8x256xf32>
    %295 = tpu.matmul %294, %184, %cst_55 {dimension_numbers = #tpu.dot_dimension_numbers<[1], [0], [0], [1], [0, 0, 1, 1], [], []>} : vector<8x64xbf16>, vector<64x256xbf16>, vector<8x256xf32> -> vector<8x256xf32>
    %296 = arith.addf %293, %295 : vector<8x256xf32>
    %297 = math.tanh %296 : vector<8x256xf32>
    %298 = arith.negf %296 : vector<8x256xf32>
    %299 = math.exp %298 : vector<8x256xf32>
    %cst_56 = arith.constant 1.000000e+00 : f32
    %300 = vector.broadcast %cst_56 : f32 to vector<8x256xf32>
    %301 = arith.addf %300, %299 : vector<8x256xf32>
    %302 = arith.divf %300, %301 : vector<8x256xf32>
    %303 = arith.select %5, %297, %302 : vector<8x256xi1>, vector<8x256xf32>
    %304 = vector.extract_strided_slice %303 {offsets = [0, 0], sizes = [8, 64], strides = [1, 1]} : vector<8x256xf32> to vector<8x64xf32>
    %305 = vector.extract_strided_slice %303 {offsets = [0, 64], sizes = [8, 64], strides = [1, 1]} : vector<8x256xf32> to vector<8x64xf32>
    %306 = vector.extract_strided_slice %303 {offsets = [0, 128], sizes = [8, 64], strides = [1, 1]} : vector<8x256xf32> to vector<8x64xf32>
    %307 = vector.extract_strided_slice %303 {offsets = [0, 192], sizes = [8, 64], strides = [1, 1]} : vector<8x256xf32> to vector<8x64xf32>
    %308 = arith.mulf %305, %290 : vector<8x64xf32>
    %309 = arith.mulf %304, %306 : vector<8x64xf32>
    %310 = arith.addf %308, %309 : vector<8x64xf32>
    %311 = math.tanh %310 : vector<8x64xf32>
    %312 = arith.mulf %307, %311 : vector<8x64xf32>
    %313 = vector.extract_strided_slice %190 {offsets = [48, 0], sizes = [8, 256], strides = [1, 1]} : vector<64x256xf32> to vector<8x256xf32>
    %314 = arith.truncf %312 : vector<8x64xf32> to vector<8x64xbf16>
    %cst_57 = arith.constant dense<0.000000e+00> : vector<8x256xf32>
    %315 = tpu.matmul %314, %184, %cst_57 {dimension_numbers = #tpu.dot_dimension_numbers<[1], [0], [0], [1], [0, 0, 1, 1], [], []>} : vector<8x64xbf16>, vector<64x256xbf16>, vector<8x256xf32> -> vector<8x256xf32>
    %316 = arith.addf %313, %315 : vector<8x256xf32>
    %317 = math.tanh %316 : vector<8x256xf32>
    %318 = arith.negf %316 : vector<8x256xf32>
    %319 = math.exp %318 : vector<8x256xf32>
    %cst_58 = arith.constant 1.000000e+00 : f32
    %320 = vector.broadcast %cst_58 : f32 to vector<8x256xf32>
    %321 = arith.addf %320, %319 : vector<8x256xf32>
    %322 = arith.divf %320, %321 : vector<8x256xf32>
    %323 = arith.select %5, %317, %322 : vector<8x256xi1>, vector<8x256xf32>
    %324 = vector.extract_strided_slice %323 {offsets = [0, 0], sizes = [8, 64], strides = [1, 1]} : vector<8x256xf32> to vector<8x64xf32>
    %325 = vector.extract_strided_slice %323 {offsets = [0, 64], sizes = [8, 64], strides = [1, 1]} : vector<8x256xf32> to vector<8x64xf32>
    %326 = vector.extract_strided_slice %323 {offsets = [0, 128], sizes = [8, 64], strides = [1, 1]} : vector<8x256xf32> to vector<8x64xf32>
    %327 = vector.extract_strided_slice %323 {offsets = [0, 192], sizes = [8, 64], strides = [1, 1]} : vector<8x256xf32> to vector<8x64xf32>
    %328 = arith.mulf %325, %310 : vector<8x64xf32>
    %329 = arith.mulf %324, %326 : vector<8x64xf32>
    %330 = arith.addf %328, %329 : vector<8x64xf32>
    %331 = math.tanh %330 : vector<8x64xf32>
    %332 = arith.mulf %327, %331 : vector<8x64xf32>
    %333 = vector.extract_strided_slice %190 {offsets = [56, 0], sizes = [8, 256], strides = [1, 1]} : vector<64x256xf32> to vector<8x256xf32>
    %334 = arith.truncf %332 : vector<8x64xf32> to vector<8x64xbf16>
    %cst_59 = arith.constant dense<0.000000e+00> : vector<8x256xf32>
    %335 = tpu.matmul %334, %184, %cst_59 {dimension_numbers = #tpu.dot_dimension_numbers<[1], [0], [0], [1], [0, 0, 1, 1], [], []>} : vector<8x64xbf16>, vector<64x256xbf16>, vector<8x256xf32> -> vector<8x256xf32>
    %336 = arith.addf %333, %335 : vector<8x256xf32>
    %337 = math.tanh %336 : vector<8x256xf32>
    %338 = arith.negf %336 : vector<8x256xf32>
    %339 = math.exp %338 : vector<8x256xf32>
    %cst_60 = arith.constant 1.000000e+00 : f32
    %340 = vector.broadcast %cst_60 : f32 to vector<8x256xf32>
    %341 = arith.addf %340, %339 : vector<8x256xf32>
    %342 = arith.divf %340, %341 : vector<8x256xf32>
    %343 = arith.select %5, %337, %342 : vector<8x256xi1>, vector<8x256xf32>
    %344 = vector.extract_strided_slice %343 {offsets = [0, 0], sizes = [8, 64], strides = [1, 1]} : vector<8x256xf32> to vector<8x64xf32>
    %345 = vector.extract_strided_slice %343 {offsets = [0, 64], sizes = [8, 64], strides = [1, 1]} : vector<8x256xf32> to vector<8x64xf32>
    %346 = vector.extract_strided_slice %343 {offsets = [0, 128], sizes = [8, 64], strides = [1, 1]} : vector<8x256xf32> to vector<8x64xf32>
    %347 = vector.extract_strided_slice %343 {offsets = [0, 192], sizes = [8, 64], strides = [1, 1]} : vector<8x256xf32> to vector<8x64xf32>
    %348 = arith.mulf %345, %330 : vector<8x64xf32>
    %349 = arith.mulf %344, %346 : vector<8x64xf32>
    %350 = arith.addf %348, %349 : vector<8x64xf32>
    %351 = math.tanh %350 : vector<8x64xf32>
    %352 = arith.mulf %347, %351 : vector<8x64xf32>
    %353 = arith.truncf %352 : vector<8x64xf32> to vector<8x64xbf16>
    %c0_61 = arith.constant 0 : index
    %c0_62 = arith.constant 0 : index
    %354 = vector.load %arg7[%c0_61, %c0_62] : memref<64x32xbf16, #tpu.memory_space<vmem>>, vector<64x32xbf16>
    %cst_63 = arith.constant dense<0.000000e+00> : vector<8x32xf32>
    %355 = tpu.matmul %353, %354, %cst_63 {dimension_numbers = #tpu.dot_dimension_numbers<[1], [0], [0], [1], [0, 0, 1, 1], [], []>} : vector<8x64xbf16>, vector<64x32xbf16>, vector<8x32xf32> -> vector<8x32xf32>
    %c0_64 = arith.constant 0 : index
    %c0_65 = arith.constant 0 : index
    %356 = vector.load %arg8[%c0_64, %c0_65] : memref<1x32xf32, #tpu.memory_space<vmem>>, vector<1x32xf32>
    %357 = vector.broadcast %356 : vector<1x32xf32> to vector<8x32xf32>
    %358 = arith.addf %355, %357 : vector<8x32xf32>
    %cst_66 = arith.constant 0.000000e+00 : f32
    %359 = vector.broadcast %cst_66 : f32 to vector<8x32xf32>
    %360 = arith.maximumf %358, %359 : vector<8x32xf32>
    %361 = arith.truncf %360 : vector<8x32xf32> to vector<8x32xbf16>
    %c0_67 = arith.constant 0 : index
    %c0_68 = arith.constant 0 : index
    %362 = vector.load %arg9[%c0_67, %c0_68] : memref<32x128xbf16, #tpu.memory_space<vmem>>, vector<32x128xbf16>
    %cst_69 = arith.constant dense<0.000000e+00> : vector<8x128xf32>
    %363 = tpu.matmul %361, %362, %cst_69 {dimension_numbers = #tpu.dot_dimension_numbers<[1], [0], [0], [1], [0, 0, 1, 1], [], []>} : vector<8x32xbf16>, vector<32x128xbf16>, vector<8x128xf32> -> vector<8x128xf32>
    %c0_70 = arith.constant 0 : index
    %c0_71 = arith.constant 0 : index
    %364 = vector.load %arg10[%c0_70, %c0_71] : memref<1x128xf32, #tpu.memory_space<vmem>>, vector<1x128xf32>
    %365 = vector.broadcast %364 : vector<1x128xf32> to vector<8x128xf32>
    %366 = arith.addf %363, %365 : vector<8x128xf32>
    %367 = arith.negf %366 : vector<8x128xf32>
    %368 = math.exp %367 : vector<8x128xf32>
    %cst_72 = arith.constant 1.000000e+00 : f32
    %369 = vector.broadcast %cst_72 : f32 to vector<8x128xf32>
    %370 = arith.addf %369, %368 : vector<8x128xf32>
    %371 = arith.divf %369, %370 : vector<8x128xf32>
    %c0_73 = arith.constant 0 : index
    %c0_74 = arith.constant 0 : index
    %372 = vector.load %arg11[%c0_73, %c0_74] : memref<8x128xf32, #tpu.memory_space<vmem>>, vector<8x128xf32>
    tpu.vector_store %arg11[%c0_73, %c0_74], %371 {strides = array<i32>} : memref<8x128xf32, #tpu.memory_space<vmem>>, vector<8x128xf32>,
    return
  }
}

</mosaic_0001>

<llo_original>
// kernel: tpu_custom_call.1
$region0: #{tpu_custom_call.1}
  #allocation0 [shape = 'u32[]', space=smem, size = 0x4, offset = 0x4, fixed_abs, tag = 'smem constant byte address 0x4 - core index']
  #allocation1 [shape = 'u32[144,128]{1,0:T(1,128)}', space=vmem, size = 0x12000, scoped, tag = 'internal scratch']
  #allocation2 [shape = 'f32[64,64]{1,0:T(8,128)}', space=vmem, size = 0x8000, scoped, tag = 'scratch operand']
  %s0 = inlined_call_operand.vmem [shape: bf16[64,32], index: 0, kind: input, shape index: {}]
  %s1 = inlined_call_operand.vmem [shape: bf16[32,256], index: 1, kind: input, shape index: {}]
  %s2 = inlined_call_operand.vmem [shape: bf16[64,256], index: 2, kind: input, shape index: {}]
  %s3 = inlined_call_operand.hbm [shape: f32[1,256], index: 3, kind: input, shape index: {}]
  %s4 = inlined_call_operand.hbm [shape: bf16[64,256], index: 4, kind: input, shape index: {}]
  %s5 = inlined_call_operand.hbm [shape: bf16[64,256], index: 5, kind: input, shape index: {}]
  %s6 = inlined_call_operand.hbm [shape: f32[1,256], index: 6, kind: input, shape index: {}]
  %s7 = inlined_call_operand.vmem [shape: bf16[64,32], index: 7, kind: input, shape index: {}]
  %s8 = inlined_call_operand.hbm [shape: f32[1,32], index: 8, kind: input, shape index: {}]
  %s9 = inlined_call_operand.vmem [shape: bf16[32,128], index: 9, kind: input, shape index: {}]
  %s10 = inlined_call_operand.vmem [shape: f32[1,128], index: 10, kind: input, shape index: {}]
  %s11 = inlined_call_operand.hbm [shape: f32[8,128], index: 11, kind: output, shape index: {}]
  %s12 = sld [smem:[#allocation0]]
  $region74: #{tpu_custom_call.1} parent=0
    _
  %s14 = ssub.s32 1, %s12
  %s15 = scalar_select 0, %s14, %s12
  $region1: #{tpu_custom_call.1} parent=0
    #allocation3 [shape = 'u8[1024]{0}', space=vmem, size = 0x400, scoped, tag = 'input window, operand 3, single buffered']
    #allocation4 [shape = 's32[1]{0}', space=sflag, size = 0x4, scoped, tag = 'scoped memory for tpu_custom_call.1']
    #allocation5 [shape = 's32[1]{0}', space=sflag, size = 0x4, scoped, tag = 'scoped memory for tpu_custom_call.1']
    #allocation6 [shape = 'u8[32768]{0}', space=vmem, size = 0x8000, scoped, tag = 'input window, operand 4, single buffered']
    #allocation7 [shape = 's32[1]{0}', space=sflag, size = 0x4, scoped, tag = 'scoped memory for tpu_custom_call.1']
    #allocation8 [shape = 'u8[32768]{0}', space=vmem, size = 0x8000, scoped, tag = 'input window, operand 5, single buffered']
    #allocation9 [shape = 'u8[1024]{0}', space=vmem, size = 0x400, scoped, tag = 'input window, operand 6, single buffered']
    #allocation10 [shape = 's32[1]{0}', space=sflag, size = 0x4, scoped, tag = 'scoped memory for tpu_custom_call.1']
    #allocation11 [shape = 'u8[512]{0}', space=vmem, size = 0x400, scoped, tag = 'input window, operand 8, single buffered']
    #allocation12 [shape = 'u8[4096]{0}', space=vmem, size = 0x1000, scoped, tag = 'output window, operand 0, single buffered']
    %16 = vsyncpa [#allocation4], 0
    %17 = vsyncpa [#allocation7], 0
    %18 = vsyncpa [#allocation10], 0
    %19 = vsyncpa [#allocation5], 0
    // Predicated region
    $region2: #{tpu_custom_call.1} parent=1 // pred_check
      _
    $region3: #{tpu_custom_call.1} parent=1 // pred_check_branch
      %21 = sbr.rel (0) target = $region5
    $region4: #{tpu_custom_call.1} parent=1 // pred_region
      _
    $region5: #{tpu_custom_call.1} parent=1 // pred_fallthru
      _
    // Predicated region
    $region6: #{tpu_custom_call.1} parent=1 // pred_check
      _
    $region7: #{tpu_custom_call.1} parent=1 // pred_check_branch
      %23 = sbr.rel (0) target = $region9
    $region8: #{tpu_custom_call.1} parent=1 // pred_region
      _
    $region9: #{tpu_custom_call.1} parent=1 // pred_fallthru
      _
    // Predicated region
    $region10: #{tpu_custom_call.1} parent=1 // pred_check
      _
    $region11: #{tpu_custom_call.1} parent=1 // pred_check_branch
      %25 = sbr.rel (0) target = $region13
    $region12: #{tpu_custom_call.1} parent=1 // pred_region
      _
    $region13: #{tpu_custom_call.1} parent=1 // pred_fallthru
      _
    // Predicated region
    $region14: #{tpu_custom_call.1} parent=1 // pred_check
      _
    $region15: #{tpu_custom_call.1} parent=1 // pred_check_branch
      %27 = sbr.rel (0) target = $region17
    $region16: #{tpu_custom_call.1} parent=1 // pred_region
      %s29 = ssub.s32 32, 32
      %30 = vsyncadd [#allocation4], %s29
      %s32 = sshll.u32 [#allocation3], 4
      %s33 = int_to_ptr.vmem [resolvable:$true] %s32
      %35 = dma.hbm_to_vmem [thread:$0]  %s3, 32, %s33, [#allocation4]
    $region17: #{tpu_custom_call.1} parent=1 // pred_fallthru
      _
    // Predicated region
    $region18: #{tpu_custom_call.1} parent=1 // pred_check
      _
    $region19: #{tpu_custom_call.1} parent=1 // pred_check_branch
      %37 = sbr.rel (0) target = $region21
    $region20: #{tpu_custom_call.1} parent=1 // pred_region
      %s39 = ssub.s32 1024, 1024
      %40 = vsyncadd [#allocation7], %s39
      %s41 = sshll.u32 [#allocation6], 4
      %s42 = int_to_ptr.vmem [resolvable:$true] %s41
      %47 = dma.hbm_to_vmem [thread:$0]  %s4, 1024, %s42, [#allocation7], 128, 128, 8
    $region21: #{tpu_custom_call.1} parent=1 // pred_fallthru
      _
    // Predicated region
    $region22: #{tpu_custom_call.1} parent=1 // pred_check
      _
    $region23: #{tpu_custom_call.1} parent=1 // pred_check_branch
      %49 = sbr.rel (0) target = $region25
    $region24: #{tpu_custom_call.1} parent=1 // pred_region
      %s51 = ssub.s32 1024, 1024
      %52 = vsyncadd [#allocation7], %s51
      %s53 = sshll.u32 [#allocation8], 4
      %s54 = int_to_ptr.vmem [resolvable:$true] %s53
      %59 = dma.hbm_to_vmem [thread:$0]  %s5, 1024, %s54, [#allocation7], 128, 128, 8
    $region25: #{tpu_custom_call.1} parent=1 // pred_fallthru
      _
    // Predicated region
    $region26: #{tpu_custom_call.1} parent=1 // pred_check
      _
    $region27: #{tpu_custom_call.1} parent=1 // pred_check_branch
      %61 = sbr.rel (0) target = $region29
    $region28: #{tpu_custom_call.1} parent=1 // pred_region
      %s63 = ssub.s32 32, 32
      %64 = vsyncadd [#allocation10], %s63
      %s66 = sshll.u32 [#allocation9], 4
      %s67 = int_to_ptr.vmem [resolvable:$true] %s66
      %69 = dma.hbm_to_vmem [thread:$0]  %s6, 32, %s67, [#allocation10]
    $region29: #{tpu_custom_call.1} parent=1 // pred_fallthru
      _
    // Predicated region
    $region30: #{tpu_custom_call.1} parent=1 // pred_check
      _
    $region31: #{tpu_custom_call.1} parent=1 // pred_check_branch
      %71 = sbr.rel (0) target = $region33
    $region32: #{tpu_custom_call.1} parent=1 // pred_region
      _
    $region33: #{tpu_custom_call.1} parent=1 // pred_fallthru
      _
    // Predicated region
    $region34: #{tpu_custom_call.1} parent=1 // pred_check
      _
    $region35: #{tpu_custom_call.1} parent=1 // pred_check_branch
      %73 = sbr.rel (0) target = $region37
    $region36: #{tpu_custom_call.1} parent=1 // pred_region
      %s75 = ssub.s32 16, 16
      %76 = vsyncadd [#allocation10], %s75
      %s78 = sshll.u32 [#allocation11], 4
      %s79 = int_to_ptr.vmem [resolvable:$true] %s78
      %81 = dma.hbm_to_vmem [thread:$0]  %s8, 16, %s79, [#allocation10]
    $region37: #{tpu_custom_call.1} parent=1 // pred_fallthru
      _
    // Predicated region
    $region38: #{tpu_custom_call.1} parent=1 // pred_check
      _
    $region39: #{tpu_custom_call.1} parent=1 // pred_check_branch
      %83 = sbr.rel (0) target = $region41
    $region40: #{tpu_custom_call.1} parent=1 // pred_region
      _
    $region41: #{tpu_custom_call.1} parent=1 // pred_fallthru
      _
    // Predicated region
    $region42: #{tpu_custom_call.1} parent=1 // pred_check
      _
    $region43: #{tpu_custom_call.1} parent=1 // pred_check_branch
      %85 = sbr.rel (0) target = $region45
    $region44: #{tpu_custom_call.1} parent=1 // pred_region
      _
    $region45: #{tpu_custom_call.1} parent=1 // pred_fallthru
      _
    // Predicated region
    $region46: #{tpu_custom_call.1} parent=1 // pred_check
      _
    $region47: #{tpu_custom_call.1} parent=1 // pred_check_branch
      %87 = sbr.rel (0) target = $region49
    $region48: #{tpu_custom_call.1} parent=1 // pred_region
      %88 = dma.done [#allocation4], 32
    $region49: #{tpu_custom_call.1} parent=1 // pred_fallthru
      _
    // Predicated region
    $region50: #{tpu_custom_call.1} parent=1 // pred_check
      _
    $region51: #{tpu_custom_call.1} parent=1 // pred_check_branch
      %90 = sbr.rel (0) target = $region53
    $region52: #{tpu_custom_call.1} parent=1 // pred_region
      %91 = dma.done [#allocation7], 1024
    $region53: #{tpu_custom_call.1} parent=1 // pred_fallthru
      _
    // Predicated region
    $region54: #{tpu_custom_call.1} parent=1 // pred_check
      _
    $region55: #{tpu_custom_call.1} parent=1 // pred_check_branch
      %93 = sbr.rel (0) target = $region57
    $region56: #{tpu_custom_call.1} parent=1 // pred_region
      %94 = dma.done [#allocation7], 1024
    $region57: #{tpu_custom_call.1} parent=1 // pred_fallthru
      _
    // Predicated region
    $region58: #{tpu_custom_call.1} parent=1 // pred_check
      _
    $region59: #{tpu_custom_call.1} parent=1 // pred_check_branch
      %96 = sbr.rel (0) target = $region61
    $region60: #{tpu_custom_call.1} parent=1 // pred_region
      %97 = dma.done [#allocation10], 32
    $region61: #{tpu_custom_call.1} parent=1 // pred_fallthru
      _
    // Predicated region
    $region62: #{tpu_custom_call.1} parent=1 // pred_check
      _
    $region63: #{tpu_custom_call.1} parent=1 // pred_check_branch
      %99 = sbr.rel (0) target = $region65
    $region64: #{tpu_custom_call.1} parent=1 // pred_region
      %100 = dma.done [#allocation10], 16
    $region65: #{tpu_custom_call.1} parent=1 // pred_fallthru
      _
    %v102 = vlaneseq
    %v103 = vand.u32 %v102, 127
    %v104 = vadd.s32 %v103, 128
    %vm105 = vcmp.ge.s32.totalorder %v103, 128
    %vm106 = vcmp.ge.s32.totalorder %v104, 128
    %vm107 = vcmp.lt.s32.totalorder %v103, 192
    %vm108 = vcmp.lt.s32.totalorder %v104, 192
    %vm109 = vmand %vm105, %vm107
    %vm110 = vmand %vm106, %vm108
    %v111 = vld [vmem:[%s1] sm:$0xff]
    %v112 = vld [vmem:[%s1 + $0x8] sm:$0xff]
    %v113 = vld [vmem:[%s1 + $0x10] sm:$0xff]
    %v114 = vld [vmem:[%s1 + $0x18] sm:$0xff]
    %v115 = vld [vmem:[%s2] sm:$0xff]
    %v116 = vld [vmem:[%s2 + $0x8] sm:$0xff]
    %v117 = vld [vmem:[%s2 + $0x10] sm:$0xff]
    %v118 = vld [vmem:[%s2 + $0x18] sm:$0xff]
    %v119 = vld [vmem:[%s2 + $0x20] sm:$0xff]
    %v120 = vld [vmem:[%s2 + $0x28] sm:$0xff]
    %v121 = vld [vmem:[%s2 + $0x30] sm:$0xff]
    %v122 = vld [vmem:[%s2 + $0x38] sm:$0xff]
    %v123 = vld [vmem:[#allocation3] sm:$0x3]
    %v124 = vld [vmem:[%s0] sm:$0xf]
    %v125 = vld [vmem:[%s0 + $0x4] sm:$0xf]
    %v126 = vld [vmem:[%s0 + $0x8] sm:$0xf]
    %v127 = vld [vmem:[%s0 + $0xc] sm:$0xf]
    %v128 = vld [vmem:[%s0 + $0x10] sm:$0xf]
    %v129 = vld [vmem:[%s0 + $0x14] sm:$0xf]
    %v130 = vld [vmem:[%s0 + $0x18] sm:$0xf]
    %v131 = vld [vmem:[%s0 + $0x1c] sm:$0xf]
    %v133 = vlaneseq
    %v134 = vshrl.u32 %v133, 7
    %v135 = vsub.s32 0, %v134
    %v136 = vrot.slane %v123, %v135
    %v137 = vlaneseq
    %v138 = vshrl.u32 %v137, 7
    %v139 = vsub.s32 1, %v138
    %v140 = vrot.slane %v123, %v139
    %v151 = vunpack.c.l.b16 %v124
    %v152 = vunpack.c.l.b16 %v125
    %v153 = vunpack.c.l.b16 %v126
    %v154 = vunpack.c.l.b16 %v127
    %v155 = vunpack.c.l.b16 %v128
    %v156 = vunpack.c.l.b16 %v129
    %v157 = vunpack.c.l.b16 %v130
    %v158 = vunpack.c.l.b16 %v131
    %v159 = vpack.c.b16 %v152, %v151
    %v160 = vpack.c.b16 %v154, %v153
    %v161 = vpack.c.b16 %v156, %v155
    %v162 = vpack.c.b16 %v158, %v157
    %v167 = vunpack.c.l.b16 %v111
    %v168 = vunpack.c.h.b16 %v111
    %v169 = vunpack.c.l.b16 %v112
    %v170 = vunpack.c.h.b16 %v112
    %v171 = vunpack.c.l.b16 %v113
    %v172 = vunpack.c.h.b16 %v113
    %v173 = vunpack.c.l.b16 %v114
    %v174 = vunpack.c.h.b16 %v114
    %v175 = vpack.c.b16 %v169, %v167
    %v176 = vpack.c.b16 %v170, %v168
    %v177 = vpack.c.b16 %v173, %v171
    %v178 = vpack.c.b16 %v174, %v172
    %vm183 = vcmask 261120
    %v185 = vsel %vm183, %v159, 0
    %v188 = vsel %vm183, %v160, 0
    %v191 = vsel %vm183, %v161, 0
    %v194 = vsel %vm183, %v162, 0
    %196 = vmatprep.subr.bf16.mxu0 0
    %197 = vmatpush1.bf16.msra.mxu0 0
    %198 = vmatprep.subr.bf16.mxu0 0
    %199 = vmatpush1.bf16.msra.mxu0 0
    %200 = vmatprep.subr.bf16.mxu0 0
    %201 = vmatpush1.bf16.msra.mxu0 0
    %202 = vmatprep.subr.bf16.mxu0 0
    %203 = vmatpush1.bf16.msra.mxu0 0
    %204 = vmatprep.subr.bf16.mxu0 0
    %205 = vmatpush1.bf16.msra.mxu0 0
    %206 = vmatprep.subr.bf16.mxu0 0
    %207 = vmatpush1.bf16.msra.mxu0 0
    %208 = vmatprep.subr.bf16.mxu0 %v178
    %209 = vmatpush1.bf16.msra.mxu0 %v177
    %210 = vmatprep.subr.bf16.mxu0 %v176
    %211 = vmatpush1.bf16.msra.mxu0 %v175
    %212 = vmatprep.subr.bf16.mxu0 0
    %213 = vmatpush2.bf16.msra.mxu0 0
    %214 = vmatprep.subr.bf16.mxu0 0
    %215 = vmatpush2.bf16.msra.mxu0 0
    %216 = vmatprep.subr.bf16.mxu0 0
    %217 = vmatpush2.bf16.msra.mxu0 0
    %218 = vmatprep.subr.bf16.mxu0 0
    %219 = vmatpush2.bf16.msra.mxu0 0
    %220 = vmatprep.subr.bf16.mxu0 0
    %221 = vmatpush2.bf16.msra.mxu0 0
    %222 = vmatprep.subr.bf16.mxu0 0
    %223 = vmatpush2.bf16.msra.mxu0 0
    %224 = vmatprep.subr.bf16.mxu0 0
    %225 = vmatpush2.bf16.msra.mxu0 0
    %226 = vmatprep.subr.bf16.mxu0 0
    %227 = vmatpush2.bf16.msra.mxu0 0
    %228 = vmatprep.mubr.bf16.mxu0 0
    %229 = vmatmul.mubr.bf16.gmra.mxu0 %v185
    %v230 = vpop.f32.mrf.mxu0
    %v231 = vadd.f32 %v136, %v230
    %v232 = vpop.f32.mrf.mxu0
    %v233 = vadd.f32 %v140, %v232
    %v234 = vpop.f32.mrf.mxu0
    %v235 = vadd.f32 %v136, %v234
    %v236 = vpop.f32.mrf.mxu0
    %v237 = vadd.f32 %v140, %v236
    %238 = vmatprep.mubr.bf16.mxu0 0
    %239 = vmatmul.mubr.bf16.gmra.mxu0 %v188
    %v240 = vpop.f32.mrf.mxu0
    %v241 = vadd.f32 %v136, %v240
    %v242 = vpop.f32.mrf.mxu0
    %v243 = vadd.f32 %v140, %v242
    %v244 = vpop.f32.mrf.mxu0
    %v245 = vadd.f32 %v136, %v244
    %v246 = vpop.f32.mrf.mxu0
    %v247 = vadd.f32 %v140, %v246
    %248 = vmatprep.mubr.bf16.mxu0 0
    %249 = vmatmul.mubr.bf16.gmra.mxu0 %v191
    %v250 = vpop.f32.mrf.mxu0
    %v251 = vadd.f32 %v136, %v250
    %v252 = vpop.f32.mrf.mxu0
    %v253 = vadd.f32 %v140, %v252
    %v254 = vpop.f32.mrf.mxu0
    %v255 = vadd.f32 %v136, %v254
    %v256 = vpop.f32.mrf.mxu0
    %v257 = vadd.f32 %v140, %v256
    %258 = vmatprep.mubr.bf16.mxu0 0
    %259 = vmatmul.mubr.bf16.gmra.mxu0 %v194
    %v260 = vpop.f32.mrf.mxu0
    %v261 = vadd.f32 %v136, %v260
    %v262 = vpop.f32.mrf.mxu0
    %v263 = vadd.f32 %v140, %v262
    %v264 = vpop.f32.mrf.mxu0
    %v265 = vadd.f32 %v136, %v264
    %v266 = vpop.f32.mrf.mxu0
    %v267 = vadd.f32 %v140, %v266
    %268 = vdwg.mxu0
    %v277 = vunpack.c.l.b16 %v115
    %v278 = vunpack.c.h.b16 %v115
    %v279 = vunpack.c.l.b16 %v116
    %v280 = vunpack.c.h.b16 %v116
    %v281 = vunpack.c.l.b16 %v117
    %v282 = vunpack.c.h.b16 %v117
    %v283 = vunpack.c.l.b16 %v118
    %v284 = vunpack.c.h.b16 %v118
    %v285 = vunpack.c.l.b16 %v119
    %v286 = vunpack.c.h.b16 %v119
    %v287 = vunpack.c.l.b16 %v120
    %v288 = vunpack.c.h.b16 %v120
    %v289 = vunpack.c.l.b16 %v121
    %v290 = vunpack.c.h.b16 %v121
    %v291 = vunpack.c.l.b16 %v122
    %v292 = vunpack.c.h.b16 %v122
    %v293 = vpack.c.b16 %v279, %v277
    %v294 = vpack.c.b16 %v280, %v278
    %v295 = vpack.c.b16 %v283, %v281
    %v296 = vpack.c.b16 %v284, %v282
    %v297 = vpack.c.b16 %v287, %v285
    %v298 = vpack.c.b16 %v288, %v286
    %v299 = vpack.c.b16 %v291, %v289
    %v300 = vpack.c.b16 %v292, %v290
    %vm309 = vcmask 523264
    %v311 = vsel %vm309, 0, 0
    %313 = vmatprep.subr.bf16.mxu0 0
    %314 = vmatpush1.bf16.msra.mxu0 0
    %315 = vmatprep.subr.bf16.mxu0 0
    %316 = vmatpush1.bf16.msra.mxu0 0
    %317 = vmatprep.subr.bf16.mxu0 0
    %318 = vmatpush1.bf16.msra.mxu0 0
    %319 = vmatprep.subr.bf16.mxu0 0
    %320 = vmatpush1.bf16.msra.mxu0 0
    %321 = vmatprep.subr.bf16.mxu0 %v300
    %322 = vmatpush1.bf16.msra.mxu0 %v299
    %323 = vmatprep.subr.bf16.mxu0 %v298
    %324 = vmatpush1.bf16.msra.mxu0 %v297
    %325 = vmatprep.subr.bf16.mxu0 %v296
    %326 = vmatpush1.bf16.msra.mxu0 %v295
    %327 = vmatprep.subr.bf16.mxu0 %v294
    %328 = vmatpush1.bf16.msra.mxu0 %v293
    %329 = vmatprep.subr.bf16.mxu0 0
    %330 = vmatpush2.bf16.msra.mxu0 0
    %331 = vmatprep.subr.bf16.mxu0 0
    %332 = vmatpush2.bf16.msra.mxu0 0
    %333 = vmatprep.subr.bf16.mxu0 0
    %334 = vmatpush2.bf16.msra.mxu0 0
    %335 = vmatprep.subr.bf16.mxu0 0
    %336 = vmatpush2.bf16.msra.mxu0 0
    %337 = vmatprep.subr.bf16.mxu0 0
    %338 = vmatpush2.bf16.msra.mxu0 0
    %339 = vmatprep.subr.bf16.mxu0 0
    %340 = vmatpush2.bf16.msra.mxu0 0
    %341 = vmatprep.subr.bf16.mxu0 0
    %342 = vmatpush2.bf16.msra.mxu0 0
    %343 = vmatprep.subr.bf16.mxu0 0
    %344 = vmatpush2.bf16.msra.mxu0 0
    %345 = vmatprep.mubr.bf16.mxu0 0
    %346 = vmatmul.mubr.bf16.gmra.mxu0 %v311
    %v347 = vpop.f32.mrf.mxu0
    %v348 = vadd.f32 0.0, %v347
    %v349 = vpop.f32.mrf.mxu0
    %v350 = vadd.f32 0.0, %v349
    %v351 = vpop.f32.mrf.mxu0
    %v352 = vpop.f32.mrf.mxu0
    %353 = vdwg.mxu0
    %v354 = vadd.f32 %v231, %v348
    %v355 = vadd.f32 %v233, %v350
    %v356 = vtanh.pop %v354
    %v357 = vtanh.pop %v355
    %v358 = vxor.u32 %v354, 2147483648
    %v359 = vxor.u32 %v355, 2147483648
    %v360 = vmul.f32 %v358, 1.442695
    %v361 = vpow.pop %v360
    %v362 = vmul.f32 %v359, 1.442695
    %v363 = vpow.pop %v362
    %v364 = vadd.f32 %v361, 1.0
    %v365 = vadd.f32 %v363, 1.0
    %v366 = vrcp.pop %v364
    %v367 = vmul.f32 1.0, %v366
    %v368 = vrcp.pop %v365
    %v369 = vmul.f32 1.0, %v368
    %v370 = vsel %vm109, %v356, %v367
    %v371 = vsel %vm110, %v357, %v369
    %v372 = vmul.f32 %v370, 0.0
    %v373 = vmul.f32 %v370, %v371
    %375 = vrot.lane.b32.xlu0 %v373, 64
    %v376 = vpop.permute.xlu0 %375
    %v378 = vadd.f32 %v372, %v376
    %v379 = vtanh.pop %v378
    %v380 = vmul.f32 %v371, %v379
    %382 = vrot.lane.b32.xlu0 %v380, 64
    %v383 = vpop.permute.xlu0 %382
    %385 = vst.msk [vmem:[#allocation2] sm:$0xff] %vm309, %v383
    %v386 = vpack.c.bf16 %v380, %v380
    %388 = vrot.lane.b32.xlu0 %v386, 64
    %v389 = vpop.permute.xlu0 %388
    %v391 = vsel %vm309, %v389, 0
    %393 = vmatprep.subr.bf16.mxu0 0
    %394 = vmatpush1.bf16.msra.mxu0 0
    %395 = vmatprep.subr.bf16.mxu0 0
    %396 = vmatpush1.bf16.msra.mxu0 0
    %397 = vmatprep.subr.bf16.mxu0 0
    %398 = vmatpush1.bf16.msra.mxu0 0
    %399 = vmatprep.subr.bf16.mxu0 0
    %400 = vmatpush1.bf16.msra.mxu0 0
    %401 = vmatprep.subr.bf16.mxu0 %v300
    %402 = vmatpush1.bf16.msra.mxu0 %v299
    %403 = vmatprep.subr.bf16.mxu0 %v298
    %404 = vmatpush1.bf16.msra.mxu0 %v297
    %405 = vmatprep.subr.bf16.mxu0 %v296
    %406 = vmatpush1.bf16.msra.mxu0 %v295
    %407 = vmatprep.subr.bf16.mxu0 %v294
    %408 = vmatpush1.bf16.msra.mxu0 %v293
    %409 = vmatprep.subr.bf16.mxu0 0
    %410 = vmatpush2.bf16.msra.mxu0 0
    %411 = vmatprep.subr.bf16.mxu0 0
    %412 = vmatpush2.bf16.msra.mxu0 0
    %413 = vmatprep.subr.bf16.mxu0 0
    %414 = vmatpush2.bf16.msra.mxu0 0
    %415 = vmatprep.subr.bf16.mxu0 0
    %416 = vmatpush2.bf16.msra.mxu0 0
    %417 = vmatprep.subr.bf16.mxu0 0
    %418 = vmatpush2.bf16.msra.mxu0 0
    %419 = vmatprep.subr.bf16.mxu0 0
    %420 = vmatpush2.bf16.msra.mxu0 0
    %421 = vmatprep.subr.bf16.mxu0 0
    %422 = vmatpush2.bf16.msra.mxu0 0
    %423 = vmatprep.subr.bf16.mxu0 0
    %424 = vmatpush2.bf16.msra.mxu0 0
    %425 = vmatprep.mubr.bf16.mxu0 0
    %426 = vmatmul.mubr.bf16.gmra.mxu0 %v391
    %v427 = vpop.f32.mrf.mxu0
    %v428 = vadd.f32 0.0, %v427
    %v429 = vpop.f32.mrf.mxu0
    %v430 = vadd.f32 0.0, %v429
    %v431 = vpop.f32.mrf.mxu0
    %v432 = vpop.f32.mrf.mxu0
    %433 = vdwg.mxu0
    %v434 = vadd.f32 %v235, %v428
    %v435 = vadd.f32 %v237, %v430
    %v436 = vtanh.pop %v434
    %v437 = vtanh.pop %v435
    %v438 = vxor.u32 %v434, 2147483648
    %v439 = vxor.u32 %v435, 2147483648
    %v440 = vmul.f32 %v438, 1.442695
    %v441 = vpow.pop %v440
    %v442 = vmul.f32 %v439, 1.442695
    %v443 = vpow.pop %v442
    %v444 = vadd.f32 %v441, 1.0
    %v445 = vadd.f32 %v443, 1.0
    %v446 = vrcp.pop %v444
    %v447 = vmul.f32 1.0, %v446
    %v448 = vrcp.pop %v445
    %v449 = vmul.f32 1.0, %v448
    %v450 = vsel %vm109, %v436, %v447
    %v451 = vsel %vm110, %v437, %v449
    %v452 = vmul.f32 %v450, %v378
    %v453 = vmul.f32 %v450, %v451
    %455 = vrot.lane.b32.xlu0 %v453, 64
    %v456 = vpop.permute.xlu0 %455
    %v458 = vadd.f32 %v452, %v456
    %v459 = vtanh.pop %v458
    %v460 = vmul.f32 %v451, %v459
    %462 = vrot.lane.b32.xlu0 %v460, 64
    %v463 = vpop.permute.xlu0 %462
    %465 = vst.msk [vmem:[#allocation2 + $0x8] sm:$0xff] %vm309, %v463
    %v466 = vpack.c.bf16 %v460, %v460
    %468 = vrot.lane.b32.xlu0 %v466, 64
    %v469 = vpop.permute.xlu0 %468
    %v471 = vsel %vm309, %v469, 0
    %473 = vmatprep.subr.bf16.mxu0 0
    %474 = vmatpush1.bf16.msra.mxu0 0
    %475 = vmatprep.subr.bf16.mxu0 0
    %476 = vmatpush1.bf16.msra.mxu0 0
    %477 = vmatprep.subr.bf16.mxu0 0
    %478 = vmatpush1.bf16.msra.mxu0 0
    %479 = vmatprep.subr.bf16.mxu0 0
    %480 = vmatpush1.bf16.msra.mxu0 0
    %481 = vmatprep.subr.bf16.mxu0 %v300
    %482 = vmatpush1.bf16.msra.mxu0 %v299
    %483 = vmatprep.subr.bf16.mxu0 %v298
    %484 = vmatpush1.bf16.msra.mxu0 %v297
    %485 = vmatprep.subr.bf16.mxu0 %v296
    %486 = vmatpush1.bf16.msra.mxu0 %v295
    %487 = vmatprep.subr.bf16.mxu0 %v294
    %488 = vmatpush1.bf16.msra.mxu0 %v293
    %489 = vmatprep.subr.bf16.mxu0 0
    %490 = vmatpush2.bf16.msra.mxu0 0
    %491 = vmatprep.subr.bf16.mxu0 0
    %492 = vmatpush2.bf16.msra.mxu0 0
    %493 = vmatprep.subr.bf16.mxu0 0
    %494 = vmatpush2.bf16.msra.mxu0 0
    %495 = vmatprep.subr.bf16.mxu0 0
    %496 = vmatpush2.bf16.msra.mxu0 0
    %497 = vmatprep.subr.bf16.mxu0 0
    %498 = vmatpush2.bf16.msra.mxu0 0
    %499 = vmatprep.subr.bf16.mxu0 0
    %500 = vmatpush2.bf16.msra.mxu0 0
    %501 = vmatprep.subr.bf16.mxu0 0
    %502 = vmatpush2.bf16.msra.mxu0 0
    %503 = vmatprep.subr.bf16.mxu0 0
    %504 = vmatpush2.bf16.msra.mxu0 0
    %505 = vmatprep.mubr.bf16.mxu0 0
    %506 = vmatmul.mubr.bf16.gmra.mxu0 %v471
    %v507 = vpop.f32.mrf.mxu0
    %v508 = vadd.f32 0.0, %v507
    %v509 = vpop.f32.mrf.mxu0
    %v510 = vadd.f32 0.0, %v509
    %v511 = vpop.f32.mrf.mxu0
    %v512 = vpop.f32.mrf.mxu0
    %513 = vdwg.mxu0
    %v514 = vadd.f32 %v241, %v508
    %v515 = vadd.f32 %v243, %v510
    %v516 = vtanh.pop %v514
    %v517 = vtanh.pop %v515
    %v518 = vxor.u32 %v514, 2147483648
    %v519 = vxor.u32 %v515, 2147483648
    %v520 = vmul.f32 %v518, 1.442695
    %v521 = vpow.pop %v520
    %v522 = vmul.f32 %v519, 1.442695
    %v523 = vpow.pop %v522
    %v524 = vadd.f32 %v521, 1.0
    %v525 = vadd.f32 %v523, 1.0
    %v526 = vrcp.pop %v524
    %v527 = vmul.f32 1.0, %v526
    %v528 = vrcp.pop %v525
    %v529 = vmul.f32 1.0, %v528
    %v530 = vsel %vm109, %v516, %v527
    %v531 = vsel %vm110, %v517, %v529
    %v532 = vmul.f32 %v530, %v458
    %v533 = vmul.f32 %v530, %v531
    %535 = vrot.lane.b32.xlu0 %v533, 64
    %v536 = vpop.permute.xlu0 %535
    %v538 = vadd.f32 %v532, %v536
    %v539 = vtanh.pop %v538
    %v540 = vmul.f32 %v531, %v539
    %542 = vrot.lane.b32.xlu0 %v540, 64
    %v543 = vpop.permute.xlu0 %542
    %545 = vst.msk [vmem:[#allocation2 + $0x10] sm:$0xff] %vm309, %v543
    %v546 = vpack.c.bf16 %v540, %v540
    %548 = vrot.lane.b32.xlu0 %v546, 64
    %v549 = vpop.permute.xlu0 %548
    %v551 = vsel %vm309, %v549, 0
    %553 = vmatprep.subr.bf16.mxu0 0
    %554 = vmatpush1.bf16.msra.mxu0 0
    %555 = vmatprep.subr.bf16.mxu0 0
    %556 = vmatpush1.bf16.msra.mxu0 0
    %557 = vmatprep.subr.bf16.mxu0 0
    %558 = vmatpush1.bf16.msra.mxu0 0
    %559 = vmatprep.subr.bf16.mxu0 0
    %560 = vmatpush1.bf16.msra.mxu0 0
    %561 = vmatprep.subr.bf16.mxu0 %v300
    %562 = vmatpush1.bf16.msra.mxu0 %v299
    %563 = vmatprep.subr.bf16.mxu0 %v298
    %564 = vmatpush1.bf16.msra.mxu0 %v297
    %565 = vmatprep.subr.bf16.mxu0 %v296
    %566 = vmatpush1.bf16.msra.mxu0 %v295
    %567 = vmatprep.subr.bf16.mxu0 %v294
    %568 = vmatpush1.bf16.msra.mxu0 %v293
    %569 = vmatprep.subr.bf16.mxu0 0
    %570 = vmatpush2.bf16.msra.mxu0 0
    %571 = vmatprep.subr.bf16.mxu0 0
    %572 = vmatpush2.bf16.msra.mxu0 0
    %573 = vmatprep.subr.bf16.mxu0 0
    %574 = vmatpush2.bf16.msra.mxu0 0
    %575 = vmatprep.subr.bf16.mxu0 0
    %576 = vmatpush2.bf16.msra.mxu0 0
    %577 = vmatprep.subr.bf16.mxu0 0
    %578 = vmatpush2.bf16.msra.mxu0 0
    %579 = vmatprep.subr.bf16.mxu0 0
    %580 = vmatpush2.bf16.msra.mxu0 0
    %581 = vmatprep.subr.bf16.mxu0 0
    %582 = vmatpush2.bf16.msra.mxu0 0
    %583 = vmatprep.subr.bf16.mxu0 0
    %584 = vmatpush2.bf16.msra.mxu0 0
    %585 = vmatprep.mubr.bf16.mxu0 0
    %586 = vmatmul.mubr.bf16.gmra.mxu0 %v551
    %v587 = vpop.f32.mrf.mxu0
    %v588 = vadd.f32 0.0, %v587
    %v589 = vpop.f32.mrf.mxu0
    %v590 = vadd.f32 0.0, %v589
    %v591 = vpop.f32.mrf.mxu0
    %v592 = vpop.f32.mrf.mxu0
    %593 = vdwg.mxu0
    %v594 = vadd.f32 %v245, %v588
    %v595 = vadd.f32 %v247, %v590
    %v596 = vtanh.pop %v594
    %v597 = vtanh.pop %v595
    %v598 = vxor.u32 %v594, 2147483648
    %v599 = vxor.u32 %v595, 2147483648
    %v600 = vmul.f32 %v598, 1.442695
    %v601 = vpow.pop %v600
    %v602 = vmul.f32 %v599, 1.442695
    %v603 = vpow.pop %v602
    %v604 = vadd.f32 %v601, 1.0
    %v605 = vadd.f32 %v603, 1.0
    %v606 = vrcp.pop %v604
    %v607 = vmul.f32 1.0, %v606
    %v608 = vrcp.pop %v605
    %v609 = vmul.f32 1.0, %v608
    %v610 = vsel %vm109, %v596, %v607
    %v611 = vsel %vm110, %v597, %v609
    %v612 = vmul.f32 %v610, %v538
    %v613 = vmul.f32 %v610, %v611
    %615 = vrot.lane.b32.xlu0 %v613, 64
    %v616 = vpop.permute.xlu0 %615
    %v618 = vadd.f32 %v612, %v616
    %v619 = vtanh.pop %v618
    %v620 = vmul.f32 %v611, %v619
    %622 = vrot.lane.b32.xlu0 %v620, 64
    %v623 = vpop.permute.xlu0 %622
    %625 = vst.msk [vmem:[#allocation2 + $0x18] sm:$0xff] %vm309, %v623
    %v626 = vpack.c.bf16 %v620, %v620
    %628 = vrot.lane.b32.xlu0 %v626, 64
    %v629 = vpop.permute.xlu0 %628
    %v631 = vsel %vm309, %v629, 0
    %633 = vmatprep.subr.bf16.mxu0 0
    %634 = vmatpush1.bf16.msra.mxu0 0
    %635 = vmatprep.subr.bf16.mxu0 0
    %636 = vmatpush1.bf16.msra.mxu0 0
    %637 = vmatprep.subr.bf16.mxu0 0
    %638 = vmatpush1.bf16.msra.mxu0 0
    %639 = vmatprep.subr.bf16.mxu0 0
    %640 = vmatpush1.bf16.msra.mxu0 0
    %641 = vmatprep.subr.bf16.mxu0 %v300
    %642 = vmatpush1.bf16.msra.mxu0 %v299
    %643 = vmatprep.subr.bf16.mxu0 %v298
    %644 = vmatpush1.bf16.msra.mxu0 %v297
    %645 = vmatprep.subr.bf16.mxu0 %v296
    %646 = vmatpush1.bf16.msra.mxu0 %v295
    %647 = vmatprep.subr.bf16.mxu0 %v294
    %648 = vmatpush1.bf16.msra.mxu0 %v293
    %649 = vmatprep.subr.bf16.mxu0 0
    %650 = vmatpush2.bf16.msra.mxu0 0
    %651 = vmatprep.subr.bf16.mxu0 0
    %652 = vmatpush2.bf16.msra.mxu0 0
    %653 = vmatprep.subr.bf16.mxu0 0
    %654 = vmatpush2.bf16.msra.mxu0 0
    %655 = vmatprep.subr.bf16.mxu0 0
    %656 = vmatpush2.bf16.msra.mxu0 0
    %657 = vmatprep.subr.bf16.mxu0 0
    %658 = vmatpush2.bf16.msra.mxu0 0
    %659 = vmatprep.subr.bf16.mxu0 0
    %660 = vmatpush2.bf16.msra.mxu0 0
    %661 = vmatprep.subr.bf16.mxu0 0
    %662 = vmatpush2.bf16.msra.mxu0 0
    %663 = vmatprep.subr.bf16.mxu0 0
    %664 = vmatpush2.bf16.msra.mxu0 0
    %665 = vmatprep.mubr.bf16.mxu0 0
    %666 = vmatmul.mubr.bf16.gmra.mxu0 %v631
    %v667 = vpop.f32.mrf.mxu0
    %v668 = vadd.f32 0.0, %v667
    %v669 = vpop.f32.mrf.mxu0
    %v670 = vadd.f32 0.0, %v669
    %v671 = vpop.f32.mrf.mxu0
    %v672 = vpop.f32.mrf.mxu0
    %673 = vdwg.mxu0
    %v674 = vadd.f32 %v251, %v668
    %v675 = vadd.f32 %v253, %v670
    %v676 = vtanh.pop %v674
    %v677 = vtanh.pop %v675
    %v678 = vxor.u32 %v674, 2147483648
    %v679 = vxor.u32 %v675, 2147483648
    %v680 = vmul.f32 %v678, 1.442695
    %v681 = vpow.pop %v680
    %v682 = vmul.f32 %v679, 1.442695
    %v683 = vpow.pop %v682
    %v684 = vadd.f32 %v681, 1.0
    %v685 = vadd.f32 %v683, 1.0
    %v686 = vrcp.pop %v684
    %v687 = vmul.f32 1.0, %v686
    %v688 = vrcp.pop %v685
    %v689 = vmul.f32 1.0, %v688
    %v690 = vsel %vm109, %v676, %v687
    %v691 = vsel %vm110, %v677, %v689
    %v692 = vmul.f32 %v690, %v618
    %v693 = vmul.f32 %v690, %v691
    %695 = vrot.lane.b32.xlu0 %v693, 64
    %v696 = vpop.permute.xlu0 %695
    %v698 = vadd.f32 %v692, %v696
    %v699 = vtanh.pop %v698
    %v700 = vmul.f32 %v691, %v699
    %702 = vrot.lane.b32.xlu0 %v700, 64
    %v703 = vpop.permute.xlu0 %702
    %705 = vst.msk [vmem:[#allocation2 + $0x20] sm:$0xff] %vm309, %v703
    %v706 = vpack.c.bf16 %v700, %v700
    %708 = vrot.lane.b32.xlu0 %v706, 64
    %v709 = vpop.permute.xlu0 %708
    %v711 = vsel %vm309, %v709, 0
    %713 = vmatprep.subr.bf16.mxu0 0
    %714 = vmatpush1.bf16.msra.mxu0 0
    %715 = vmatprep.subr.bf16.mxu0 0
    %716 = vmatpush1.bf16.msra.mxu0 0
    %717 = vmatprep.subr.bf16.mxu0 0
    %718 = vmatpush1.bf16.msra.mxu0 0
    %719 = vmatprep.subr.bf16.mxu0 0
    %720 = vmatpush1.bf16.msra.mxu0 0
    %721 = vmatprep.subr.bf16.mxu0 %v300
    %722 = vmatpush1.bf16.msra.mxu0 %v299
    %723 = vmatprep.subr.bf16.mxu0 %v298
    %724 = vmatpush1.bf16.msra.mxu0 %v297
    %725 = vmatprep.subr.bf16.mxu0 %v296
    %726 = vmatpush1.bf16.msra.mxu0 %v295
    %727 = vmatprep.subr.bf16.mxu0 %v294
    %728 = vmatpush1.bf16.msra.mxu0 %v293
    %729 = vmatprep.subr.bf16.mxu0 0
    %730 = vmatpush2.bf16.msra.mxu0 0
    %731 = vmatprep.subr.bf16.mxu0 0
    %732 = vmatpush2.bf16.msra.mxu0 0
    %733 = vmatprep.subr.bf16.mxu0 0
    %734 = vmatpush2.bf16.msra.mxu0 0
    %735 = vmatprep.subr.bf16.mxu0 0
    %736 = vmatpush2.bf16.msra.mxu0 0
    %737 = vmatprep.subr.bf16.mxu0 0
    %738 = vmatpush2.bf16.msra.mxu0 0
    %739 = vmatprep.subr.bf16.mxu0 0
    %740 = vmatpush2.bf16.msra.mxu0 0
    %741 = vmatprep.subr.bf16.mxu0 0
    %742 = vmatpush2.bf16.msra.mxu0 0
    %743 = vmatprep.subr.bf16.mxu0 0
    %744 = vmatpush2.bf16.msra.mxu0 0
    %745 = vmatprep.mubr.bf16.mxu0 0
    %746 = vmatmul.mubr.bf16.gmra.mxu0 %v711
    %v747 = vpop.f32.mrf.mxu0
    %v748 = vadd.f32 0.0, %v747
    %v749 = vpop.f32.mrf.mxu0
    %v750 = vadd.f32 0.0, %v749
    %v751 = vpop.f32.mrf.mxu0
    %v752 = vpop.f32.mrf.mxu0
    %753 = vdwg.mxu0
    %v754 = vadd.f32 %v255, %v748
    %v755 = vadd.f32 %v257, %v750
    %v756 = vtanh.pop %v754
    %v757 = vtanh.pop %v755
    %v758 = vxor.u32 %v754, 2147483648
    %v759 = vxor.u32 %v755, 2147483648
    %v760 = vmul.f32 %v758, 1.442695
    %v761 = vpow.pop %v760
    %v762 = vmul.f32 %v759, 1.442695
    %v763 = vpow.pop %v762
    %v764 = vadd.f32 %v761, 1.0
    %v765 = vadd.f32 %v763, 1.0
    %v766 = vrcp.pop %v764
    %v767 = vmul.f32 1.0, %v766
    %v768 = vrcp.pop %v765
    %v769 = vmul.f32 1.0, %v768
    %v770 = vsel %vm109, %v756, %v767
    %v771 = vsel %vm110, %v757, %v769
    %v772 = vmul.f32 %v770, %v698
    %v773 = vmul.f32 %v770, %v771
    %775 = vrot.lane.b32.xlu0 %v773, 64
    %v776 = vpop.permute.xlu0 %775
    %v778 = vadd.f32 %v772, %v776
    %v779 = vtanh.pop %v778
    %v780 = vmul.f32 %v771, %v779
    %782 = vrot.lane.b32.xlu0 %v780, 64
    %v783 = vpop.permute.xlu0 %782
    %785 = vst.msk [vmem:[#allocation2 + $0x28] sm:$0xff] %vm309, %v783
    %v786 = vpack.c.bf16 %v780, %v780
    %788 = vrot.lane.b32.xlu0 %v786, 64
    %v789 = vpop.permute.xlu0 %788
    %v791 = vsel %vm309, %v789, 0
    %793 = vmatprep.subr.bf16.mxu0 0
    %794 = vmatpush1.bf16.msra.mxu0 0
    %795 = vmatprep.subr.bf16.mxu0 0
    %796 = vmatpush1.bf16.msra.mxu0 0
    %797 = vmatprep.subr.bf16.mxu0 0
    %798 = vmatpush1.bf16.msra.mxu0 0
    %799 = vmatprep.subr.bf16.mxu0 0
    %800 = vmatpush1.bf16.msra.mxu0 0
    %801 = vmatprep.subr.bf16.mxu0 %v300
    %802 = vmatpush1.bf16.msra.mxu0 %v299
    %803 = vmatprep.subr.bf16.mxu0 %v298
    %804 = vmatpush1.bf16.msra.mxu0 %v297
    %805 = vmatprep.subr.bf16.mxu0 %v296
    %806 = vmatpush1.bf16.msra.mxu0 %v295
    %807 = vmatprep.subr.bf16.mxu0 %v294
    %808 = vmatpush1.bf16.msra.mxu0 %v293
    %809 = vmatprep.subr.bf16.mxu0 0
    %810 = vmatpush2.bf16.msra.mxu0 0
    %811 = vmatprep.subr.bf16.mxu0 0
    %812 = vmatpush2.bf16.msra.mxu0 0
    %813 = vmatprep.subr.bf16.mxu0 0
    %814 = vmatpush2.bf16.msra.mxu0 0
    %815 = vmatprep.subr.bf16.mxu0 0
    %816 = vmatpush2.bf16.msra.mxu0 0
    %817 = vmatprep.subr.bf16.mxu0 0
    %818 = vmatpush2.bf16.msra.mxu0 0
    %819 = vmatprep.subr.bf16.mxu0 0
    %820 = vmatpush2.bf16.msra.mxu0 0
    %821 = vmatprep.subr.bf16.mxu0 0
    %822 = vmatpush2.bf16.msra.mxu0 0
    %823 = vmatprep.subr.bf16.mxu0 0
    %824 = vmatpush2.bf16.msra.mxu0 0
    %825 = vmatprep.mubr.bf16.mxu0 0
    %826 = vmatmul.mubr.bf16.gmra.mxu0 %v791
    %v827 = vpop.f32.mrf.mxu0
    %v828 = vadd.f32 0.0, %v827
    %v829 = vpop.f32.mrf.mxu0
    %v830 = vadd.f32 0.0, %v829
    %v831 = vpop.f32.mrf.mxu0
    %v832 = vpop.f32.mrf.mxu0
    %833 = vdwg.mxu0
    %v834 = vadd.f32 %v261, %v828
    %v835 = vadd.f32 %v263, %v830
    %v836 = vtanh.pop %v834
    %v837 = vtanh.pop %v835
    %v838 = vxor.u32 %v834, 2147483648
    %v839 = vxor.u32 %v835, 2147483648
    %v840 = vmul.f32 %v838, 1.442695
    %v841 = vpow.pop %v840
    %v842 = vmul.f32 %v839, 1.442695
    %v843 = vpow.pop %v842
    %v844 = vadd.f32 %v841, 1.0
    %v845 = vadd.f32 %v843, 1.0
    %v846 = vrcp.pop %v844
    %v847 = vmul.f32 1.0, %v846
    %v848 = vrcp.pop %v845
    %v849 = vmul.f32 1.0, %v848
    %v850 = vsel %vm109, %v836, %v847
    %v851 = vsel %vm110, %v837, %v849
    %v852 = vmul.f32 %v850, %v778
    %v853 = vmul.f32 %v850, %v851
    %855 = vrot.lane.b32.xlu0 %v853, 64
    %v856 = vpop.permute.xlu0 %855
    %v858 = vadd.f32 %v852, %v856
    %v859 = vtanh.pop %v858
    %v860 = vmul.f32 %v851, %v859
    %862 = vrot.lane.b32.xlu0 %v860, 64
    %v863 = vpop.permute.xlu0 %862
    %865 = vst.msk [vmem:[#allocation2 + $0x30] sm:$0xff] %vm309, %v863
    %v866 = vpack.c.bf16 %v860, %v860
    %868 = vrot.lane.b32.xlu0 %v866, 64
    %v869 = vpop.permute.xlu0 %868
    %v871 = vsel %vm309, %v869, 0
    %873 = vmatprep.subr.bf16.mxu0 0
    %874 = vmatpush1.bf16.msra.mxu0 0
    %875 = vmatprep.subr.bf16.mxu0 0
    %876 = vmatpush1.bf16.msra.mxu0 0
    %877 = vmatprep.subr.bf16.mxu0 0
    %878 = vmatpush1.bf16.msra.mxu0 0
    %879 = vmatprep.subr.bf16.mxu0 0
    %880 = vmatpush1.bf16.msra.mxu0 0
    %881 = vmatprep.subr.bf16.mxu0 %v300
    %882 = vmatpush1.bf16.msra.mxu0 %v299
    %883 = vmatprep.subr.bf16.mxu0 %v298
    %884 = vmatpush1.bf16.msra.mxu0 %v297
    %885 = vmatprep.subr.bf16.mxu0 %v296
    %886 = vmatpush1.bf16.msra.mxu0 %v295
    %887 = vmatprep.subr.bf16.mxu0 %v294
    %888 = vmatpush1.bf16.msra.mxu0 %v293
    %889 = vmatprep.subr.bf16.mxu0 0
    %890 = vmatpush2.bf16.msra.mxu0 0
    %891 = vmatprep.subr.bf16.mxu0 0
    %892 = vmatpush2.bf16.msra.mxu0 0
    %893 = vmatprep.subr.bf16.mxu0 0
    %894 = vmatpush2.bf16.msra.mxu0 0
    %895 = vmatprep.subr.bf16.mxu0 0
    %896 = vmatpush2.bf16.msra.mxu0 0
    %897 = vmatprep.subr.bf16.mxu0 0
    %898 = vmatpush2.bf16.msra.mxu0 0
    %899 = vmatprep.subr.bf16.mxu0 0
    %900 = vmatpush2.bf16.msra.mxu0 0
    %901 = vmatprep.subr.bf16.mxu0 0
    %902 = vmatpush2.bf16.msra.mxu0 0
    %903 = vmatprep.subr.bf16.mxu0 0
    %904 = vmatpush2.bf16.msra.mxu0 0
    %905 = vmatprep.mubr.bf16.mxu0 0
    %906 = vmatmul.mubr.bf16.gmra.mxu0 %v871
    %v907 = vpop.f32.mrf.mxu0
    %v908 = vadd.f32 0.0, %v907
    %v909 = vpop.f32.mrf.mxu0
    %v910 = vadd.f32 0.0, %v909
    %v911 = vpop.f32.mrf.mxu0
    %v912 = vpop.f32.mrf.mxu0
    %913 = vdwg.mxu0
    %v914 = vadd.f32 %v265, %v908
    %v915 = vadd.f32 %v267, %v910
    %v916 = vtanh.pop %v914
    %v917 = vtanh.pop %v915
    %v918 = vxor.u32 %v914, 2147483648
    %v919 = vxor.u32 %v915, 2147483648
    %v920 = vmul.f32 %v918, 1.442695
    %v921 = vpow.pop %v920
    %v922 = vmul.f32 %v919, 1.442695
    %v923 = vpow.pop %v922
    %v924 = vadd.f32 %v921, 1.0
    %v925 = vadd.f32 %v923, 1.0
    %v926 = vrcp.pop %v924
    %v927 = vmul.f32 1.0, %v926
    %v928 = vrcp.pop %v925
    %v929 = vmul.f32 1.0, %v928
    %v930 = vsel %vm109, %v916, %v927
    %v931 = vsel %vm110, %v917, %v929
    %v932 = vmul.f32 %v930, %v858
    %v933 = vmul.f32 %v930, %v931
    %935 = vrot.lane.b32.xlu0 %v933, 64
    %v936 = vpop.permute.xlu0 %935
    %v938 = vadd.f32 %v932, %v936
    %v939 = vtanh.pop %v938
    %v940 = vmul.f32 %v931, %v939
    %942 = vrot.lane.b32.xlu0 %v940, 64
    %v943 = vpop.permute.xlu0 %942
    %945 = vst.msk [vmem:[#allocation2 + $0x38] sm:$0xff] %vm309, %v943
    %v946 = vld [vmem:[#allocation6] sm:$0xff]
    %v947 = vld [vmem:[#allocation6 + $0x8] sm:$0xff]
    %v948 = vld [vmem:[#allocation6 + $0x10] sm:$0xff]
    %v949 = vld [vmem:[#allocation6 + $0x18] sm:$0xff]
    %v950 = vld [vmem:[#allocation6 + $0x20] sm:$0xff]
    %v951 = vld [vmem:[#allocation6 + $0x28] sm:$0xff]
    %v952 = vld [vmem:[#allocation6 + $0x30] sm:$0xff]
    %v953 = vld [vmem:[#allocation6 + $0x38] sm:$0xff]
    %v954 = vld [vmem:[#allocation8] sm:$0xff]
    %v955 = vld [vmem:[#allocation8 + $0x8] sm:$0xff]
    %v956 = vld [vmem:[#allocation8 + $0x10] sm:$0xff]
    %v957 = vld [vmem:[#allocation8 + $0x18] sm:$0xff]
    %v958 = vld [vmem:[#allocation8 + $0x20] sm:$0xff]
    %v959 = vld [vmem:[#allocation8 + $0x28] sm:$0xff]
    %v960 = vld [vmem:[#allocation8 + $0x30] sm:$0xff]
    %v961 = vld [vmem:[#allocation8 + $0x38] sm:$0xff]
    %v962 = vld [vmem:[#allocation9] sm:$0x3]
    %v963 = vld [vmem:[#allocation2] sm:$0xff]
    %v964 = vld [vmem:[#allocation2 + $0x8] sm:$0xff]
    %v965 = vld [vmem:[#allocation2 + $0x10] sm:$0xff]
    %v966 = vld [vmem:[#allocation2 + $0x18] sm:$0xff]
    %v967 = vld [vmem:[#allocation2 + $0x20] sm:$0xff]
    %v968 = vld [vmem:[#allocation2 + $0x28] sm:$0xff]
    %v969 = vld [vmem:[#allocation2 + $0x30] sm:$0xff]
    %v970 = vld [vmem:[#allocation2 + $0x38] sm:$0xff]
    %v971 = vpack.c.bf16 %v964, %v963
    %v972 = vpack.c.bf16 %v966, %v965
    %v973 = vpack.c.bf16 %v968, %v967
    %v974 = vpack.c.bf16 %v970, %v969
    %v976 = vlaneseq
    %v977 = vshrl.u32 %v976, 7
    %v978 = vsub.s32 0, %v977
    %v979 = vrot.slane %v962, %v978
    %v980 = vlaneseq
    %v981 = vshrl.u32 %v980, 7
    %v982 = vsub.s32 1, %v981
    %v983 = vrot.slane %v962, %v982
    %v994 = vunpack.c.l.b16 %v946
    %v995 = vunpack.c.h.b16 %v946
    %v996 = vunpack.c.l.b16 %v947
    %v997 = vunpack.c.h.b16 %v947
    %v998 = vunpack.c.l.b16 %v948
    %v999 = vunpack.c.h.b16 %v948
    %v1000 = vunpack.c.l.b16 %v949
    %v1001 = vunpack.c.h.b16 %v949
    %v1002 = vunpack.c.l.b16 %v950
    %v1003 = vunpack.c.h.b16 %v950
    %v1004 = vunpack.c.l.b16 %v951
    %v1005 = vunpack.c.h.b16 %v951
    %v1006 = vunpack.c.l.b16 %v952
    %v1007 = vunpack.c.h.b16 %v952
    %v1008 = vunpack.c.l.b16 %v953
    %v1009 = vunpack.c.h.b16 %v953
    %v1010 = vpack.c.b16 %v996, %v994
    %v1011 = vpack.c.b16 %v997, %v995
    %v1012 = vpack.c.b16 %v1000, %v998
    %v1013 = vpack.c.b16 %v1001, %v999
    %v1014 = vpack.c.b16 %v1004, %v1002
    %v1015 = vpack.c.b16 %v1005, %v1003
    %v1016 = vpack.c.b16 %v1008, %v1006
    %v1017 = vpack.c.b16 %v1009, %v1007
    %v1027 = vsel %vm309, %v971, 0
    %v1030 = vsel %vm309, %v972, 0
    %v1033 = vsel %vm309, %v973, 0
    %v1036 = vsel %vm309, %v974, 0
    %1038 = vmatprep.subr.bf16.mxu0 0
    %1039 = vmatpush1.bf16.msra.mxu0 0
    %1040 = vmatprep.subr.bf16.mxu0 0
    %1041 = vmatpush1.bf16.msra.mxu0 0
    %1042 = vmatprep.subr.bf16.mxu0 0
    %1043 = vmatpush1.bf16.msra.mxu0 0
    %1044 = vmatprep.subr.bf16.mxu0 0
    %1045 = vmatpush1.bf16.msra.mxu0 0
    %1046 = vmatprep.subr.bf16.mxu0 %v1017
    %1047 = vmatpush1.bf16.msra.mxu0 %v1016
    %1048 = vmatprep.subr.bf16.mxu0 %v1015
    %1049 = vmatpush1.bf16.msra.mxu0 %v1014
    %1050 = vmatprep.subr.bf16.mxu0 %v1013
    %1051 = vmatpush1.bf16.msra.mxu0 %v1012
    %1052 = vmatprep.subr.bf16.mxu0 %v1011
    %1053 = vmatpush1.bf16.msra.mxu0 %v1010
    %1054 = vmatprep.subr.bf16.mxu0 0
    %1055 = vmatpush2.bf16.msra.mxu0 0
    %1056 = vmatprep.subr.bf16.mxu0 0
    %1057 = vmatpush2.bf16.msra.mxu0 0
    %1058 = vmatprep.subr.bf16.mxu0 0
    %1059 = vmatpush2.bf16.msra.mxu0 0
    %1060 = vmatprep.subr.bf16.mxu0 0
    %1061 = vmatpush2.bf16.msra.mxu0 0
    %1062 = vmatprep.subr.bf16.mxu0 0
    %1063 = vmatpush2.bf16.msra.mxu0 0
    %1064 = vmatprep.subr.bf16.mxu0 0
    %1065 = vmatpush2.bf16.msra.mxu0 0
    %1066 = vmatprep.subr.bf16.mxu0 0
    %1067 = vmatpush2.bf16.msra.mxu0 0
    %1068 = vmatprep.subr.bf16.mxu0 0
    %1069 = vmatpush2.bf16.msra.mxu0 0
    %1070 = vmatprep.mubr.bf16.mxu0 0
    %1071 = vmatmul.mubr.bf16.gmra.mxu0 %v1027
    %v1072 = vpop.f32.mrf.mxu0
    %v1073 = vadd.f32 %v979, %v1072
    %v1074 = vpop.f32.mrf.mxu0
    %v1075 = vadd.f32 %v983, %v1074
    %v1076 = vpop.f32.mrf.mxu0
    %v1077 = vadd.f32 %v979, %v1076
    %v1078 = vpop.f32.mrf.mxu0
    %v1079 = vadd.f32 %v983, %v1078
    %1080 = vmatprep.mubr.bf16.mxu0 0
    %1081 = vmatmul.mubr.bf16.gmra.mxu0 %v1030
    %v1082 = vpop.f32.mrf.mxu0
    %v1083 = vadd.f32 %v979, %v1082
    %v1084 = vpop.f32.mrf.mxu0
    %v1085 = vadd.f32 %v983, %v1084
    %v1086 = vpop.f32.mrf.mxu0
    %v1087 = vadd.f32 %v979, %v1086
    %v1088 = vpop.f32.mrf.mxu0
    %v1089 = vadd.f32 %v983, %v1088
    %1090 = vmatprep.mubr.bf16.mxu0 0
    %1091 = vmatmul.mubr.bf16.gmra.mxu0 %v1033
    %v1092 = vpop.f32.mrf.mxu0
    %v1093 = vadd.f32 %v979, %v1092
    %v1094 = vpop.f32.mrf.mxu0
    %v1095 = vadd.f32 %v983, %v1094
    %v1096 = vpop.f32.mrf.mxu0
    %v1097 = vadd.f32 %v979, %v1096
    %v1098 = vpop.f32.mrf.mxu0
    %v1099 = vadd.f32 %v983, %v1098
    %1100 = vmatprep.mubr.bf16.mxu0 0
    %1101 = vmatmul.mubr.bf16.gmra.mxu0 %v1036
    %v1102 = vpop.f32.mrf.mxu0
    %v1103 = vadd.f32 %v979, %v1102
    %v1104 = vpop.f32.mrf.mxu0
    %v1105 = vadd.f32 %v983, %v1104
    %v1106 = vpop.f32.mrf.mxu0
    %v1107 = vadd.f32 %v979, %v1106
    %v1108 = vpop.f32.mrf.mxu0
    %v1109 = vadd.f32 %v983, %v1108
    %1110 = vdwg.mxu0
    %v1119 = vunpack.c.l.b16 %v954
    %v1120 = vunpack.c.h.b16 %v954
    %v1121 = vunpack.c.l.b16 %v955
    %v1122 = vunpack.c.h.b16 %v955
    %v1123 = vunpack.c.l.b16 %v956
    %v1124 = vunpack.c.h.b16 %v956
    %v1125 = vunpack.c.l.b16 %v957
    %v1126 = vunpack.c.h.b16 %v957
    %v1127 = vunpack.c.l.b16 %v958
    %v1128 = vunpack.c.h.b16 %v958
    %v1129 = vunpack.c.l.b16 %v959
    %v1130 = vunpack.c.h.b16 %v959
    %v1131 = vunpack.c.l.b16 %v960
    %v1132 = vunpack.c.h.b16 %v960
    %v1133 = vunpack.c.l.b16 %v961
    %v1134 = vunpack.c.h.b16 %v961
    %v1135 = vpack.c.b16 %v1121, %v1119
    %v1136 = vpack.c.b16 %v1122, %v1120
    %v1137 = vpack.c.b16 %v1125, %v1123
    %v1138 = vpack.c.b16 %v1126, %v1124
    %v1139 = vpack.c.b16 %v1129, %v1127
    %v1140 = vpack.c.b16 %v1130, %v1128
    %v1141 = vpack.c.b16 %v1133, %v1131
    %v1142 = vpack.c.b16 %v1134, %v1132
    %1151 = vmatprep.subr.bf16.mxu0 0
    %1152 = vmatpush1.bf16.msra.mxu0 0
    %1153 = vmatprep.subr.bf16.mxu0 0
    %1154 = vmatpush1.bf16.msra.mxu0 0
    %1155 = vmatprep.subr.bf16.mxu0 0
    %1156 = vmatpush1.bf16.msra.mxu0 0
    %1157 = vmatprep.subr.bf16.mxu0 0
    %1158 = vmatpush1.bf16.msra.mxu0 0
    %1159 = vmatprep.subr.bf16.mxu0 %v1142
    %1160 = vmatpush1.bf16.msra.mxu0 %v1141
    %1161 = vmatprep.subr.bf16.mxu0 %v1140
    %1162 = vmatpush1.bf16.msra.mxu0 %v1139
    %1163 = vmatprep.subr.bf16.mxu0 %v1138
    %1164 = vmatpush1.bf16.msra.mxu0 %v1137
    %1165 = vmatprep.subr.bf16.mxu0 %v1136
    %1166 = vmatpush1.bf16.msra.mxu0 %v1135
    %1167 = vmatprep.subr.bf16.mxu0 0
    %1168 = vmatpush2.bf16.msra.mxu0 0
    %1169 = vmatprep.subr.bf16.mxu0 0
    %1170 = vmatpush2.bf16.msra.mxu0 0
    %1171 = vmatprep.subr.bf16.mxu0 0
    %1172 = vmatpush2.bf16.msra.mxu0 0
    %1173 = vmatprep.subr.bf16.mxu0 0
    %1174 = vmatpush2.bf16.msra.mxu0 0
    %1175 = vmatprep.subr.bf16.mxu0 0
    %1176 = vmatpush2.bf16.msra.mxu0 0
    %1177 = vmatprep.subr.bf16.mxu0 0
    %1178 = vmatpush2.bf16.msra.mxu0 0
    %1179 = vmatprep.subr.bf16.mxu0 0
    %1180 = vmatpush2.bf16.msra.mxu0 0
    %1181 = vmatprep.subr.bf16.mxu0 0
    %1182 = vmatpush2.bf16.msra.mxu0 0
    %1183 = vmatprep.mubr.bf16.mxu0 0
    %1184 = vmatmul.mubr.bf16.gmra.mxu0 %v311
    %v1185 = vpop.f32.mrf.mxu0
    %v1186 = vadd.f32 0.0, %v1185
    %v1187 = vpop.f32.mrf.mxu0
    %v1188 = vadd.f32 0.0, %v1187
    %v1189 = vpop.f32.mrf.mxu0
    %v1190 = vpop.f32.mrf.mxu0
    %1191 = vdwg.mxu0
    %v1192 = vadd.f32 %v1073, %v1186
    %v1193 = vadd.f32 %v1075, %v1188
    %v1194 = vtanh.pop %v1192
    %v1195 = vtanh.pop %v1193
    %v1196 = vxor.u32 %v1192, 2147483648
    %v1197 = vxor.u32 %v1193, 2147483648
    %v1198 = vmul.f32 %v1196, 1.442695
    %v1199 = vpow.pop %v1198
    %v1200 = vmul.f32 %v1197, 1.442695
    %v1201 = vpow.pop %v1200
    %v1202 = vadd.f32 %v1199, 1.0
    %v1203 = vadd.f32 %v1201, 1.0
    %v1204 = vrcp.pop %v1202
    %v1205 = vmul.f32 1.0, %v1204
    %v1206 = vrcp.pop %v1203
    %v1207 = vmul.f32 1.0, %v1206
    %v1208 = vsel %vm109, %v1194, %v1205
    %v1209 = vsel %vm110, %v1195, %v1207
    %v1210 = vmul.f32 %v1208, 0.0
    %v1211 = vmul.f32 %v1208, %v1209
    %1213 = vrot.lane.b32.xlu0 %v1211, 64
    %v1214 = vpop.permute.xlu0 %1213
    %v1216 = vadd.f32 %v1210, %v1214
    %v1217 = vtanh.pop %v1216
    %v1218 = vmul.f32 %v1209, %v1217
    %v1219 = vpack.c.bf16 %v1218, %v1218
    %1221 = vrot.lane.b32.xlu0 %v1219, 64
    %v1222 = vpop.permute.xlu0 %1221
    %v1224 = vsel %vm309, %v1222, 0
    %1226 = vmatprep.subr.bf16.mxu0 0
    %1227 = vmatpush1.bf16.msra.mxu0 0
    %1228 = vmatprep.subr.bf16.mxu0 0
    %1229 = vmatpush1.bf16.msra.mxu0 0
    %1230 = vmatprep.subr.bf16.mxu0 0
    %1231 = vmatpush1.bf16.msra.mxu0 0
    %1232 = vmatprep.subr.bf16.mxu0 0
    %1233 = vmatpush1.bf16.msra.mxu0 0
    %1234 = vmatprep.subr.bf16.mxu0 %v1142
    %1235 = vmatpush1.bf16.msra.mxu0 %v1141
    %1236 = vmatprep.subr.bf16.mxu0 %v1140
    %1237 = vmatpush1.bf16.msra.mxu0 %v1139
    %1238 = vmatprep.subr.bf16.mxu0 %v1138
    %1239 = vmatpush1.bf16.msra.mxu0 %v1137
    %1240 = vmatprep.subr.bf16.mxu0 %v1136
    %1241 = vmatpush1.bf16.msra.mxu0 %v1135
    %1242 = vmatprep.subr.bf16.mxu0 0
    %1243 = vmatpush2.bf16.msra.mxu0 0
    %1244 = vmatprep.subr.bf16.mxu0 0
    %1245 = vmatpush2.bf16.msra.mxu0 0
    %1246 = vmatprep.subr.bf16.mxu0 0
    %1247 = vmatpush2.bf16.msra.mxu0 0
    %1248 = vmatprep.subr.bf16.mxu0 0
    %1249 = vmatpush2.bf16.msra.mxu0 0
    %1250 = vmatprep.subr.bf16.mxu0 0
    %1251 = vmatpush2.bf16.msra.mxu0 0
    %1252 = vmatprep.subr.bf16.mxu0 0
    %1253 = vmatpush2.bf16.msra.mxu0 0
    %1254 = vmatprep.subr.bf16.mxu0 0
    %1255 = vmatpush2.bf16.msra.mxu0 0
    %1256 = vmatprep.subr.bf16.mxu0 0
    %1257 = vmatpush2.bf16.msra.mxu0 0
    %1258 = vmatprep.mubr.bf16.mxu0 0
    %1259 = vmatmul.mubr.bf16.gmra.mxu0 %v1224
    %v1260 = vpop.f32.mrf.mxu0
    %v1261 = vadd.f32 0.0, %v1260
    %v1262 = vpop.f32.mrf.mxu0
    %v1263 = vadd.f32 0.0, %v1262
    %v1264 = vpop.f32.mrf.mxu0
    %v1265 = vpop.f32.mrf.mxu0
    %1266 = vdwg.mxu0
    %v1267 = vadd.f32 %v1077, %v1261
    %v1268 = vadd.f32 %v1079, %v1263
    %v1269 = vtanh.pop %v1267
    %v1270 = vtanh.pop %v1268
    %v1271 = vxor.u32 %v1267, 2147483648
    %v1272 = vxor.u32 %v1268, 2147483648
    %v1273 = vmul.f32 %v1271, 1.442695
    %v1274 = vpow.pop %v1273
    %v1275 = vmul.f32 %v1272, 1.442695
    %v1276 = vpow.pop %v1275
    %v1277 = vadd.f32 %v1274, 1.0
    %v1278 = vadd.f32 %v1276, 1.0
    %v1279 = vrcp.pop %v1277
    %v1280 = vmul.f32 1.0, %v1279
    %v1281 = vrcp.pop %v1278
    %v1282 = vmul.f32 1.0, %v1281
    %v1283 = vsel %vm109, %v1269, %v1280
    %v1284 = vsel %vm110, %v1270, %v1282
    %v1285 = vmul.f32 %v1283, %v1216
    %v1286 = vmul.f32 %v1283, %v1284
    %1288 = vrot.lane.b32.xlu0 %v1286, 64
    %v1289 = vpop.permute.xlu0 %1288
    %v1291 = vadd.f32 %v1285, %v1289
    %v1292 = vtanh.pop %v1291
    %v1293 = vmul.f32 %v1284, %v1292
    %v1294 = vpack.c.bf16 %v1293, %v1293
    %1296 = vrot.lane.b32.xlu0 %v1294, 64
    %v1297 = vpop.permute.xlu0 %1296
    %v1299 = vsel %vm309, %v1297, 0
    %1301 = vmatprep.subr.bf16.mxu0 0
    %1302 = vmatpush1.bf16.msra.mxu0 0
    %1303 = vmatprep.subr.bf16.mxu0 0
    %1304 = vmatpush1.bf16.msra.mxu0 0
    %1305 = vmatprep.subr.bf16.mxu0 0
    %1306 = vmatpush1.bf16.msra.mxu0 0
    %1307 = vmatprep.subr.bf16.mxu0 0
    %1308 = vmatpush1.bf16.msra.mxu0 0
    %1309 = vmatprep.subr.bf16.mxu0 %v1142
    %1310 = vmatpush1.bf16.msra.mxu0 %v1141
    %1311 = vmatprep.subr.bf16.mxu0 %v1140
    %1312 = vmatpush1.bf16.msra.mxu0 %v1139
    %1313 = vmatprep.subr.bf16.mxu0 %v1138
    %1314 = vmatpush1.bf16.msra.mxu0 %v1137
    %1315 = vmatprep.subr.bf16.mxu0 %v1136
    %1316 = vmatpush1.bf16.msra.mxu0 %v1135
    %1317 = vmatprep.subr.bf16.mxu0 0
    %1318 = vmatpush2.bf16.msra.mxu0 0
    %1319 = vmatprep.subr.bf16.mxu0 0
    %1320 = vmatpush2.bf16.msra.mxu0 0
    %1321 = vmatprep.subr.bf16.mxu0 0
    %1322 = vmatpush2.bf16.msra.mxu0 0
    %1323 = vmatprep.subr.bf16.mxu0 0
    %1324 = vmatpush2.bf16.msra.mxu0 0
    %1325 = vmatprep.subr.bf16.mxu0 0
    %1326 = vmatpush2.bf16.msra.mxu0 0
    %1327 = vmatprep.subr.bf16.mxu0 0
    %1328 = vmatpush2.bf16.msra.mxu0 0
    %1329 = vmatprep.subr.bf16.mxu0 0
    %1330 = vmatpush2.bf16.msra.mxu0 0
    %1331 = vmatprep.subr.bf16.mxu0 0
    %1332 = vmatpush2.bf16.msra.mxu0 0
    %1333 = vmatprep.mubr.bf16.mxu0 0
    %1334 = vmatmul.mubr.bf16.gmra.mxu0 %v1299
    %v1335 = vpop.f32.mrf.mxu0
    %v1336 = vadd.f32 0.0, %v1335
    %v1337 = vpop.f32.mrf.mxu0
    %v1338 = vadd.f32 0.0, %v1337
    %v1339 = vpop.f32.mrf.mxu0
    %v1340 = vpop.f32.mrf.mxu0
    %1341 = vdwg.mxu0
    %v1342 = vadd.f32 %v1083, %v1336
    %v1343 = vadd.f32 %v1085, %v1338
    %v1344 = vtanh.pop %v1342
    %v1345 = vtanh.pop %v1343
    %v1346 = vxor.u32 %v1342, 2147483648
    %v1347 = vxor.u32 %v1343, 2147483648
    %v1348 = vmul.f32 %v1346, 1.442695
    %v1349 = vpow.pop %v1348
    %v1350 = vmul.f32 %v1347, 1.442695
    %v1351 = vpow.pop %v1350
    %v1352 = vadd.f32 %v1349, 1.0
    %v1353 = vadd.f32 %v1351, 1.0
    %v1354 = vrcp.pop %v1352
    %v1355 = vmul.f32 1.0, %v1354
    %v1356 = vrcp.pop %v1353
    %v1357 = vmul.f32 1.0, %v1356
    %v1358 = vsel %vm109, %v1344, %v1355
    %v1359 = vsel %vm110, %v1345, %v1357
    %v1360 = vmul.f32 %v1358, %v1291
    %v1361 = vmul.f32 %v1358, %v1359
    %1363 = vrot.lane.b32.xlu0 %v1361, 64
    %v1364 = vpop.permute.xlu0 %1363
    %v1366 = vadd.f32 %v1360, %v1364
    %v1367 = vtanh.pop %v1366
    %v1368 = vmul.f32 %v1359, %v1367
    %v1369 = vpack.c.bf16 %v1368, %v1368
    %1371 = vrot.lane.b32.xlu0 %v1369, 64
    %v1372 = vpop.permute.xlu0 %1371
    %v1374 = vsel %vm309, %v1372, 0
    %1376 = vmatprep.subr.bf16.mxu0 0
    %1377 = vmatpush1.bf16.msra.mxu0 0
    %1378 = vmatprep.subr.bf16.mxu0 0
    %1379 = vmatpush1.bf16.msra.mxu0 0
    %1380 = vmatprep.subr.bf16.mxu0 0
    %1381 = vmatpush1.bf16.msra.mxu0 0
    %1382 = vmatprep.subr.bf16.mxu0 0
    %1383 = vmatpush1.bf16.msra.mxu0 0
    %1384 = vmatprep.subr.bf16.mxu0 %v1142
    %1385 = vmatpush1.bf16.msra.mxu0 %v1141
    %1386 = vmatprep.subr.bf16.mxu0 %v1140
    %1387 = vmatpush1.bf16.msra.mxu0 %v1139
    %1388 = vmatprep.subr.bf16.mxu0 %v1138
    %1389 = vmatpush1.bf16.msra.mxu0 %v1137
    %1390 = vmatprep.subr.bf16.mxu0 %v1136
    %1391 = vmatpush1.bf16.msra.mxu0 %v1135
    %1392 = vmatprep.subr.bf16.mxu0 0
    %1393 = vmatpush2.bf16.msra.mxu0 0
    %1394 = vmatprep.subr.bf16.mxu0 0
    %1395 = vmatpush2.bf16.msra.mxu0 0
    %1396 = vmatprep.subr.bf16.mxu0 0
    %1397 = vmatpush2.bf16.msra.mxu0 0
    %1398 = vmatprep.subr.bf16.mxu0 0
    %1399 = vmatpush2.bf16.msra.mxu0 0
    %1400 = vmatprep.subr.bf16.mxu0 0
    %1401 = vmatpush2.bf16.msra.mxu0 0
    %1402 = vmatprep.subr.bf16.mxu0 0
    %1403 = vmatpush2.bf16.msra.mxu0 0
    %1404 = vmatprep.subr.bf16.mxu0 0
    %1405 = vmatpush2.bf16.msra.mxu0 0
    %1406 = vmatprep.subr.bf16.mxu0 0
    %1407 = vmatpush2.bf16.msra.mxu0 0
    %1408 = vmatprep.mubr.bf16.mxu0 0
    %1409 = vmatmul.mubr.bf16.gmra.mxu0 %v1374
    %v1410 = vpop.f32.mrf.mxu0
    %v1411 = vadd.f32 0.0, %v1410
    %v1412 = vpop.f32.mrf.mxu0
    %v1413 = vadd.f32 0.0, %v1412
    %v1414 = vpop.f32.mrf.mxu0
    %v1415 = vpop.f32.mrf.mxu0
    %1416 = vdwg.mxu0
    %v1417 = vadd.f32 %v1087, %v1411
    %v1418 = vadd.f32 %v1089, %v1413
    %v1419 = vtanh.pop %v1417
    %v1420 = vtanh.pop %v1418
    %v1421 = vxor.u32 %v1417, 2147483648
    %v1422 = vxor.u32 %v1418, 2147483648
    %v1423 = vmul.f32 %v1421, 1.442695
    %v1424 = vpow.pop %v1423
    %v1425 = vmul.f32 %v1422, 1.442695
    %v1426 = vpow.pop %v1425
    %v1427 = vadd.f32 %v1424, 1.0
    %v1428 = vadd.f32 %v1426, 1.0
    %v1429 = vrcp.pop %v1427
    %v1430 = vmul.f32 1.0, %v1429
    %v1431 = vrcp.pop %v1428
    %v1432 = vmul.f32 1.0, %v1431
    %v1433 = vsel %vm109, %v1419, %v1430
    %v1434 = vsel %vm110, %v1420, %v1432
    %v1435 = vmul.f32 %v1433, %v1366
    %v1436 = vmul.f32 %v1433, %v1434
    %1438 = vrot.lane.b32.xlu0 %v1436, 64
    %v1439 = vpop.permute.xlu0 %1438
    %v1441 = vadd.f32 %v1435, %v1439
    %v1442 = vtanh.pop %v1441
    %v1443 = vmul.f32 %v1434, %v1442
    %v1444 = vpack.c.bf16 %v1443, %v1443
    %1446 = vrot.lane.b32.xlu0 %v1444, 64
    %v1447 = vpop.permute.xlu0 %1446
    %v1449 = vsel %vm309, %v1447, 0
    %1451 = vmatprep.subr.bf16.mxu0 0
    %1452 = vmatpush1.bf16.msra.mxu0 0
    %1453 = vmatprep.subr.bf16.mxu0 0
    %1454 = vmatpush1.bf16.msra.mxu0 0
    %1455 = vmatprep.subr.bf16.mxu0 0
    %1456 = vmatpush1.bf16.msra.mxu0 0
    %1457 = vmatprep.subr.bf16.mxu0 0
    %1458 = vmatpush1.bf16.msra.mxu0 0
    %1459 = vmatprep.subr.bf16.mxu0 %v1142
    %1460 = vmatpush1.bf16.msra.mxu0 %v1141
    %1461 = vmatprep.subr.bf16.mxu0 %v1140
    %1462 = vmatpush1.bf16.msra.mxu0 %v1139
    %1463 = vmatprep.subr.bf16.mxu0 %v1138
    %1464 = vmatpush1.bf16.msra.mxu0 %v1137
    %1465 = vmatprep.subr.bf16.mxu0 %v1136
    %1466 = vmatpush1.bf16.msra.mxu0 %v1135
    %1467 = vmatprep.subr.bf16.mxu0 0
    %1468 = vmatpush2.bf16.msra.mxu0 0
    %1469 = vmatprep.subr.bf16.mxu0 0
    %1470 = vmatpush2.bf16.msra.mxu0 0
    %1471 = vmatprep.subr.bf16.mxu0 0
    %1472 = vmatpush2.bf16.msra.mxu0 0
    %1473 = vmatprep.subr.bf16.mxu0 0
    %1474 = vmatpush2.bf16.msra.mxu0 0
    %1475 = vmatprep.subr.bf16.mxu0 0
    %1476 = vmatpush2.bf16.msra.mxu0 0
    %1477 = vmatprep.subr.bf16.mxu0 0
    %1478 = vmatpush2.bf16.msra.mxu0 0
    %1479 = vmatprep.subr.bf16.mxu0 0
    %1480 = vmatpush2.bf16.msra.mxu0 0
    %1481 = vmatprep.subr.bf16.mxu0 0
    %1482 = vmatpush2.bf16.msra.mxu0 0
    %1483 = vmatprep.mubr.bf16.mxu0 0
    %1484 = vmatmul.mubr.bf16.gmra.mxu0 %v1449
    %v1485 = vpop.f32.mrf.mxu0
    %v1486 = vadd.f32 0.0, %v1485
    %v1487 = vpop.f32.mrf.mxu0
    %v1488 = vadd.f32 0.0, %v1487
    %v1489 = vpop.f32.mrf.mxu0
    %v1490 = vpop.f32.mrf.mxu0
    %1491 = vdwg.mxu0
    %v1492 = vadd.f32 %v1093, %v1486
    %v1493 = vadd.f32 %v1095, %v1488
    %v1494 = vtanh.pop %v1492
    %v1495 = vtanh.pop %v1493
    %v1496 = vxor.u32 %v1492, 2147483648
    %v1497 = vxor.u32 %v1493, 2147483648
    %v1498 = vmul.f32 %v1496, 1.442695
    %v1499 = vpow.pop %v1498
    %v1500 = vmul.f32 %v1497, 1.442695
    %v1501 = vpow.pop %v1500
    %v1502 = vadd.f32 %v1499, 1.0
    %v1503 = vadd.f32 %v1501, 1.0
    %v1504 = vrcp.pop %v1502
    %v1505 = vmul.f32 1.0, %v1504
    %v1506 = vrcp.pop %v1503
    %v1507 = vmul.f32 1.0, %v1506
    %v1508 = vsel %vm109, %v1494, %v1505
    %v1509 = vsel %vm110, %v1495, %v1507
    %v1510 = vmul.f32 %v1508, %v1441
    %v1511 = vmul.f32 %v1508, %v1509
    %1513 = vrot.lane.b32.xlu0 %v1511, 64
    %v1514 = vpop.permute.xlu0 %1513
    %v1516 = vadd.f32 %v1510, %v1514
    %v1517 = vtanh.pop %v1516
    %v1518 = vmul.f32 %v1509, %v1517
    %v1519 = vpack.c.bf16 %v1518, %v1518
    %1521 = vrot.lane.b32.xlu0 %v1519, 64
    %v1522 = vpop.permute.xlu0 %1521
    %v1524 = vsel %vm309, %v1522, 0
    %1526 = vmatprep.subr.bf16.mxu0 0
    %1527 = vmatpush1.bf16.msra.mxu0 0
    %1528 = vmatprep.subr.bf16.mxu0 0
    %1529 = vmatpush1.bf16.msra.mxu0 0
    %1530 = vmatprep.subr.bf16.mxu0 0
    %1531 = vmatpush1.bf16.msra.mxu0 0
    %1532 = vmatprep.subr.bf16.mxu0 0
    %1533 = vmatpush1.bf16.msra.mxu0 0
    %1534 = vmatprep.subr.bf16.mxu0 %v1142
    %1535 = vmatpush1.bf16.msra.mxu0 %v1141
    %1536 = vmatprep.subr.bf16.mxu0 %v1140
    %1537 = vmatpush1.bf16.msra.mxu0 %v1139
    %1538 = vmatprep.subr.bf16.mxu0 %v1138
    %1539 = vmatpush1.bf16.msra.mxu0 %v1137
    %1540 = vmatprep.subr.bf16.mxu0 %v1136
    %1541 = vmatpush1.bf16.msra.mxu0 %v1135
    %1542 = vmatprep.subr.bf16.mxu0 0
    %1543 = vmatpush2.bf16.msra.mxu0 0
    %1544 = vmatprep.subr.bf16.mxu0 0
    %1545 = vmatpush2.bf16.msra.mxu0 0
    %1546 = vmatprep.subr.bf16.mxu0 0
    %1547 = vmatpush2.bf16.msra.mxu0 0
    %1548 = vmatprep.subr.bf16.mxu0 0
    %1549 = vmatpush2.bf16.msra.mxu0 0
    %1550 = vmatprep.subr.bf16.mxu0 0
    %1551 = vmatpush2.bf16.msra.mxu0 0
    %1552 = vmatprep.subr.bf16.mxu0 0
    %1553 = vmatpush2.bf16.msra.mxu0 0
    %1554 = vmatprep.subr.bf16.mxu0 0
    %1555 = vmatpush2.bf16.msra.mxu0 0
    %1556 = vmatprep.subr.bf16.mxu0 0
    %1557 = vmatpush2.bf16.msra.mxu0 0
    %1558 = vmatprep.mubr.bf16.mxu0 0
    %1559 = vmatmul.mubr.bf16.gmra.mxu0 %v1524
    %v1560 = vpop.f32.mrf.mxu0
    %v1561 = vadd.f32 0.0, %v1560
    %v1562 = vpop.f32.mrf.mxu0
    %v1563 = vadd.f32 0.0, %v1562
    %v1564 = vpop.f32.mrf.mxu0
    %v1565 = vpop.f32.mrf.mxu0
    %1566 = vdwg.mxu0
    %v1567 = vadd.f32 %v1097, %v1561
    %v1568 = vadd.f32 %v1099, %v1563
    %v1569 = vtanh.pop %v1567
    %v1570 = vtanh.pop %v1568
    %v1571 = vxor.u32 %v1567, 2147483648
    %v1572 = vxor.u32 %v1568, 2147483648
    %v1573 = vmul.f32 %v1571, 1.442695
    %v1574 = vpow.pop %v1573
    %v1575 = vmul.f32 %v1572, 1.442695
    %v1576 = vpow.pop %v1575
    %v1577 = vadd.f32 %v1574, 1.0
    %v1578 = vadd.f32 %v1576, 1.0
    %v1579 = vrcp.pop %v1577
    %v1580 = vmul.f32 1.0, %v1579
    %v1581 = vrcp.pop %v1578
    %v1582 = vmul.f32 1.0, %v1581
    %v1583 = vsel %vm109, %v1569, %v1580
    %v1584 = vsel %vm110, %v1570, %v1582
    %v1585 = vmul.f32 %v1583, %v1516
    %v1586 = vmul.f32 %v1583, %v1584
    %1588 = vrot.lane.b32.xlu0 %v1586, 64
    %v1589 = vpop.permute.xlu0 %1588
    %v1591 = vadd.f32 %v1585, %v1589
    %v1592 = vtanh.pop %v1591
    %v1593 = vmul.f32 %v1584, %v1592
    %v1594 = vpack.c.bf16 %v1593, %v1593
    %1596 = vrot.lane.b32.xlu0 %v1594, 64
    %v1597 = vpop.permute.xlu0 %1596
    %v1599 = vsel %vm309, %v1597, 0
    %1601 = vmatprep.subr.bf16.mxu0 0
    %1602 = vmatpush1.bf16.msra.mxu0 0
    %1603 = vmatprep.subr.bf16.mxu0 0
    %1604 = vmatpush1.bf16.msra.mxu0 0
    %1605 = vmatprep.subr.bf16.mxu0 0
    %1606 = vmatpush1.bf16.msra.mxu0 0
    %1607 = vmatprep.subr.bf16.mxu0 0
    %1608 = vmatpush1.bf16.msra.mxu0 0
    %1609 = vmatprep.subr.bf16.mxu0 %v1142
    %1610 = vmatpush1.bf16.msra.mxu0 %v1141
    %1611 = vmatprep.subr.bf16.mxu0 %v1140
    %1612 = vmatpush1.bf16.msra.mxu0 %v1139
    %1613 = vmatprep.subr.bf16.mxu0 %v1138
    %1614 = vmatpush1.bf16.msra.mxu0 %v1137
    %1615 = vmatprep.subr.bf16.mxu0 %v1136
    %1616 = vmatpush1.bf16.msra.mxu0 %v1135
    %1617 = vmatprep.subr.bf16.mxu0 0
    %1618 = vmatpush2.bf16.msra.mxu0 0
    %1619 = vmatprep.subr.bf16.mxu0 0
    %1620 = vmatpush2.bf16.msra.mxu0 0
    %1621 = vmatprep.subr.bf16.mxu0 0
    %1622 = vmatpush2.bf16.msra.mxu0 0
    %1623 = vmatprep.subr.bf16.mxu0 0
    %1624 = vmatpush2.bf16.msra.mxu0 0
    %1625 = vmatprep.subr.bf16.mxu0 0
    %1626 = vmatpush2.bf16.msra.mxu0 0
    %1627 = vmatprep.subr.bf16.mxu0 0
    %1628 = vmatpush2.bf16.msra.mxu0 0
    %1629 = vmatprep.subr.bf16.mxu0 0
    %1630 = vmatpush2.bf16.msra.mxu0 0
    %1631 = vmatprep.subr.bf16.mxu0 0
    %1632 = vmatpush2.bf16.msra.mxu0 0
    %1633 = vmatprep.mubr.bf16.mxu0 0
    %1634 = vmatmul.mubr.bf16.gmra.mxu0 %v1599
    %v1635 = vpop.f32.mrf.mxu0
    %v1636 = vadd.f32 0.0, %v1635
    %v1637 = vpop.f32.mrf.mxu0
    %v1638 = vadd.f32 0.0, %v1637
    %v1639 = vpop.f32.mrf.mxu0
    %v1640 = vpop.f32.mrf.mxu0
    %1641 = vdwg.mxu0
    %v1642 = vadd.f32 %v1103, %v1636
    %v1643 = vadd.f32 %v1105, %v1638
    %v1644 = vtanh.pop %v1642
    %v1645 = vtanh.pop %v1643
    %v1646 = vxor.u32 %v1642, 2147483648
    %v1647 = vxor.u32 %v1643, 2147483648
    %v1648 = vmul.f32 %v1646, 1.442695
    %v1649 = vpow.pop %v1648
    %v1650 = vmul.f32 %v1647, 1.442695
    %v1651 = vpow.pop %v1650
    %v1652 = vadd.f32 %v1649, 1.0
    %v1653 = vadd.f32 %v1651, 1.0
    %v1654 = vrcp.pop %v1652
    %v1655 = vmul.f32 1.0, %v1654
    %v1656 = vrcp.pop %v1653
    %v1657 = vmul.f32 1.0, %v1656
    %v1658 = vsel %vm109, %v1644, %v1655
    %v1659 = vsel %vm110, %v1645, %v1657
    %v1660 = vmul.f32 %v1658, %v1591
    %v1661 = vmul.f32 %v1658, %v1659
    %1663 = vrot.lane.b32.xlu0 %v1661, 64
    %v1664 = vpop.permute.xlu0 %1663
    %v1666 = vadd.f32 %v1660, %v1664
    %v1667 = vtanh.pop %v1666
    %v1668 = vmul.f32 %v1659, %v1667
    %v1669 = vpack.c.bf16 %v1668, %v1668
    %1671 = vrot.lane.b32.xlu0 %v1669, 64
    %v1672 = vpop.permute.xlu0 %1671
    %v1674 = vsel %vm309, %v1672, 0
    %1676 = vmatprep.subr.bf16.mxu0 0
    %1677 = vmatpush1.bf16.msra.mxu0 0
    %1678 = vmatprep.subr.bf16.mxu0 0
    %1679 = vmatpush1.bf16.msra.mxu0 0
    %1680 = vmatprep.subr.bf16.mxu0 0
    %1681 = vmatpush1.bf16.msra.mxu0 0
    %1682 = vmatprep.subr.bf16.mxu0 0
    %1683 = vmatpush1.bf16.msra.mxu0 0
    %1684 = vmatprep.subr.bf16.mxu0 %v1142
    %1685 = vmatpush1.bf16.msra.mxu0 %v1141
    %1686 = vmatprep.subr.bf16.mxu0 %v1140
    %1687 = vmatpush1.bf16.msra.mxu0 %v1139
    %1688 = vmatprep.subr.bf16.mxu0 %v1138
    %1689 = vmatpush1.bf16.msra.mxu0 %v1137
    %1690 = vmatprep.subr.bf16.mxu0 %v1136
    %1691 = vmatpush1.bf16.msra.mxu0 %v1135
    %1692 = vmatprep.subr.bf16.mxu0 0
    %1693 = vmatpush2.bf16.msra.mxu0 0
    %1694 = vmatprep.subr.bf16.mxu0 0
    %1695 = vmatpush2.bf16.msra.mxu0 0
    %1696 = vmatprep.subr.bf16.mxu0 0
    %1697 = vmatpush2.bf16.msra.mxu0 0
    %1698 = vmatprep.subr.bf16.mxu0 0
    %1699 = vmatpush2.bf16.msra.mxu0 0
    %1700 = vmatprep.subr.bf16.mxu0 0
    %1701 = vmatpush2.bf16.msra.mxu0 0
    %1702 = vmatprep.subr.bf16.mxu0 0
    %1703 = vmatpush2.bf16.msra.mxu0 0
    %1704 = vmatprep.subr.bf16.mxu0 0
    %1705 = vmatpush2.bf16.msra.mxu0 0
    %1706 = vmatprep.subr.bf16.mxu0 0
    %1707 = vmatpush2.bf16.msra.mxu0 0
    %1708 = vmatprep.mubr.bf16.mxu0 0
    %1709 = vmatmul.mubr.bf16.gmra.mxu0 %v1674
    %v1710 = vpop.f32.mrf.mxu0
    %v1711 = vadd.f32 0.0, %v1710
    %v1712 = vpop.f32.mrf.mxu0
    %v1713 = vadd.f32 0.0, %v1712
    %v1714 = vpop.f32.mrf.mxu0
    %v1715 = vpop.f32.mrf.mxu0
    %1716 = vdwg.mxu0
    %v1717 = vadd.f32 %v1107, %v1711
    %v1718 = vadd.f32 %v1109, %v1713
    %v1719 = vtanh.pop %v1717
    %v1720 = vtanh.pop %v1718
    %v1721 = vxor.u32 %v1717, 2147483648
    %v1722 = vxor.u32 %v1718, 2147483648
    %v1723 = vmul.f32 %v1721, 1.442695
    %v1724 = vpow.pop %v1723
    %v1725 = vmul.f32 %v1722, 1.442695
    %v1726 = vpow.pop %v1725
    %v1727 = vadd.f32 %v1724, 1.0
    %v1728 = vadd.f32 %v1726, 1.0
    %v1729 = vrcp.pop %v1727
    %v1730 = vmul.f32 1.0, %v1729
    %v1731 = vrcp.pop %v1728
    %v1732 = vmul.f32 1.0, %v1731
    %v1733 = vsel %vm109, %v1719, %v1730
    %v1734 = vsel %vm110, %v1720, %v1732
    %v1735 = vmul.f32 %v1733, %v1666
    %v1736 = vmul.f32 %v1733, %v1734
    %1738 = vrot.lane.b32.xlu0 %v1736, 64
    %v1739 = vpop.permute.xlu0 %1738
    %v1741 = vadd.f32 %v1735, %v1739
    %v1742 = vtanh.pop %v1741
    %v1743 = vmul.f32 %v1734, %v1742
    %v1744 = vpack.c.bf16 %v1743, %v1743
    %v1745 = vld [vmem:[%s7] sm:$0xf]
    %v1746 = vld [vmem:[%s7 + $0x4] sm:$0xf]
    %v1747 = vld [vmem:[%s7 + $0x8] sm:$0xf]
    %v1748 = vld [vmem:[%s7 + $0xc] sm:$0xf]
    %v1749 = vld [vmem:[%s7 + $0x10] sm:$0xf]
    %v1750 = vld [vmem:[%s7 + $0x14] sm:$0xf]
    %v1751 = vld [vmem:[%s7 + $0x18] sm:$0xf]
    %v1752 = vld [vmem:[%s7 + $0x1c] sm:$0xf]
    %v1753 = vld [vmem:[#allocation11] sm:$0x1]
    %v1755 = vlaneseq
    %v1756 = vshrl.u32 %v1755, 7
    %v1757 = vsub.s32 0, %v1756
    %v1758 = vrot.slane %v1753, %v1757
    %1761 = vrot.lane.b32.xlu0 %v1744, 64
    %v1762 = vpop.permute.xlu0 %1761
    %v1771 = vunpack.c.l.b16 %v1745
    %v1772 = vunpack.c.l.b16 %v1746
    %v1773 = vunpack.c.l.b16 %v1747
    %v1774 = vunpack.c.l.b16 %v1748
    %v1775 = vunpack.c.l.b16 %v1749
    %v1776 = vunpack.c.l.b16 %v1750
    %v1777 = vunpack.c.l.b16 %v1751
    %v1778 = vunpack.c.l.b16 %v1752
    %v1779 = vpack.c.b16 %v1772, %v1771
    %v1780 = vpack.c.b16 %v1774, %v1773
    %v1781 = vpack.c.b16 %v1776, %v1775
    %v1782 = vpack.c.b16 %v1778, %v1777
    %v1788 = vsel %vm309, %v1762, 0
    %1790 = vmatprep.subr.bf16.mxu0 0
    %1791 = vmatpush1.bf16.msra.mxu0 0
    %1792 = vmatprep.subr.bf16.mxu0 0
    %1793 = vmatpush1.bf16.msra.mxu0 0
    %1794 = vmatprep.subr.bf16.mxu0 0
    %1795 = vmatpush1.bf16.msra.mxu0 0
    %1796 = vmatprep.subr.bf16.mxu0 0
    %1797 = vmatpush1.bf16.msra.mxu0 0
    %1798 = vmatprep.subr.bf16.mxu0 0
    %1799 = vmatpush1.bf16.msra.mxu0 %v1782
    %1800 = vmatprep.subr.bf16.mxu0 0
    %1801 = vmatpush1.bf16.msra.mxu0 %v1781
    %1802 = vmatprep.subr.bf16.mxu0 0
    %1803 = vmatpush1.bf16.msra.mxu0 %v1780
    %1804 = vmatprep.subr.bf16.mxu0 0
    %1805 = vmatpush1.bf16.msra.mxu0 %v1779
    %1806 = vmatprep.subr.bf16.mxu0 0
    %1807 = vmatpush2.bf16.msra.mxu0 0
    %1808 = vmatprep.subr.bf16.mxu0 0
    %1809 = vmatpush2.bf16.msra.mxu0 0
    %1810 = vmatprep.subr.bf16.mxu0 0
    %1811 = vmatpush2.bf16.msra.mxu0 0
    %1812 = vmatprep.subr.bf16.mxu0 0
    %1813 = vmatpush2.bf16.msra.mxu0 0
    %1814 = vmatprep.subr.bf16.mxu0 0
    %1815 = vmatpush2.bf16.msra.mxu0 0
    %1816 = vmatprep.subr.bf16.mxu0 0
    %1817 = vmatpush2.bf16.msra.mxu0 0
    %1818 = vmatprep.subr.bf16.mxu0 0
    %1819 = vmatpush2.bf16.msra.mxu0 0
    %1820 = vmatprep.subr.bf16.mxu0 0
    %1821 = vmatpush2.bf16.msra.mxu0 0
    %1822 = vmatprep.mubr.bf16.mxu0 0
    %1823 = vmatmul.mubr.bf16.gmra.mxu0 %v1788
    %v1824 = vpop.f32.mrf.mxu0
    %v1825 = vadd.f32 %v1758, %v1824
    %v1826 = vpop.f32.mrf.mxu0
    %v1827 = vpop.f32.mrf.mxu0
    %v1828 = vpop.f32.mrf.mxu0
    %1829 = vdwg.mxu0
    %v1830 = vmax.f32 %v1825, 0.0
    %v1831 = vpack.c.bf16 %v1830, %v1830
    %v1832 = vld [vmem:[%s9] sm:$0xf]
    %v1833 = vld [vmem:[%s9 + $0x4] sm:$0xf]
    %v1834 = vld [vmem:[%s9 + $0x8] sm:$0xf]
    %v1835 = vld [vmem:[%s9 + $0xc] sm:$0xf]
    %v1836 = vld [vmem:[%s10] sm:$0x1]
    %v1838 = vlaneseq
    %v1839 = vshrl.u32 %v1838, 7
    %v1840 = vsub.s32 0, %v1839
    %v1841 = vrot.slane %v1836, %v1840
    %v1847 = vunpack.c.l.b16 %v1832
    %v1848 = vunpack.c.l.b16 %v1833
    %v1849 = vunpack.c.l.b16 %v1834
    %v1850 = vunpack.c.l.b16 %v1835
    %v1851 = vpack.c.b16 %v1848, %v1847
    %v1852 = vpack.c.b16 %v1850, %v1849
    %v1856 = vsel %vm183, %v1831, 0
    %1858 = vmatprep.subr.bf16.mxu0 0
    %1859 = vmatpush1.bf16.msra.mxu0 0
    %1860 = vmatprep.subr.bf16.mxu0 0
    %1861 = vmatpush1.bf16.msra.mxu0 0
    %1862 = vmatprep.subr.bf16.mxu0 0
    %1863 = vmatpush1.bf16.msra.mxu0 0
    %1864 = vmatprep.subr.bf16.mxu0 0
    %1865 = vmatpush1.bf16.msra.mxu0 0
    %1866 = vmatprep.subr.bf16.mxu0 0
    %1867 = vmatpush1.bf16.msra.mxu0 0
    %1868 = vmatprep.subr.bf16.mxu0 0
    %1869 = vmatpush1.bf16.msra.mxu0 0
    %1870 = vmatprep.subr.bf16.mxu0 0
    %1871 = vmatpush1.bf16.msra.mxu0 %v1852
    %1872 = vmatprep.subr.bf16.mxu0 0
    %1873 = vmatpush1.bf16.msra.mxu0 %v1851
    %1874 = vmatprep.subr.bf16.mxu0 0
    %1875 = vmatpush2.bf16.msra.mxu0 0
    %1876 = vmatprep.subr.bf16.mxu0 0
    %1877 = vmatpush2.bf16.msra.mxu0 0
    %1878 = vmatprep.subr.bf16.mxu0 0
    %1879 = vmatpush2.bf16.msra.mxu0 0
    %1880 = vmatprep.subr.bf16.mxu0 0
    %1881 = vmatpush2.bf16.msra.mxu0 0
    %1882 = vmatprep.subr.bf16.mxu0 0
    %1883 = vmatpush2.bf16.msra.mxu0 0
    %1884 = vmatprep.subr.bf16.mxu0 0
    %1885 = vmatpush2.bf16.msra.mxu0 0
    %1886 = vmatprep.subr.bf16.mxu0 0
    %1887 = vmatpush2.bf16.msra.mxu0 0
    %1888 = vmatprep.subr.bf16.mxu0 0
    %1889 = vmatpush2.bf16.msra.mxu0 0
    %1890 = vmatprep.mubr.bf16.mxu0 0
    %1891 = vmatmul.mubr.bf16.gmra.mxu0 %v1856
    %v1892 = vpop.f32.mrf.mxu0
    %v1893 = vadd.f32 %v1841, %v1892
    %v1894 = vpop.f32.mrf.mxu0
    %v1895 = vpop.f32.mrf.mxu0
    %v1896 = vpop.f32.mrf.mxu0
    %1897 = vdwg.mxu0
    %v1898 = vxor.u32 %v1893, 2147483648
    %v1899 = vmul.f32 %v1898, 1.442695
    %v1900 = vpow.pop %v1899
    %v1901 = vadd.f32 %v1900, 1.0
    %v1902 = vrcp.pop %v1901
    %v1903 = vmul.f32 1.0, %v1902
    %1904 = vst [vmem:[#allocation12] sm:$0xff] %v1903
    // Predicated region
    $region66: #{tpu_custom_call.1} parent=1 // pred_check
      _
    $region67: #{tpu_custom_call.1} parent=1 // pred_check_branch
      %1906 = sbr.rel (0) target = $region69
    $region68: #{tpu_custom_call.1} parent=1 // pred_region
      %s1908 = ssub.s32 128, 128
      %1909 = vsyncadd [#allocation5], %s1908
      %s1911 = sshll.u32 [#allocation12], 4
      %s1912 = int_to_ptr.vmem [resolvable:$true] %s1911
      %1914 = dma.vmem_to_hbm [thread:$0]  %s1912, 128, %s11, [#allocation5]
    $region69: #{tpu_custom_call.1} parent=1 // pred_fallthru
      _
    // Predicated region
    $region70: #{tpu_custom_call.1} parent=1 // pred_check
      _
    $region71: #{tpu_custom_call.1} parent=1 // pred_check_branch
      %1916 = sbr.rel (0) target = $region73
    $region72: #{tpu_custom_call.1} parent=1 // pred_region
      %1917 = dma.done [#allocation5], 128
    $region73: #{tpu_custom_call.1} parent=1 // pred_fallthru
      _
    %1918 = vsyncpa [#allocation4], 1
    %1919 = vsyncpa [#allocation7], 1
    %1920 = vsyncpa [#allocation10], 1
    %1921 = vsyncpa [#allocation5], 1

</llo_original>
